<compile_context>
chip_gen: v6e
topology: v6e:2x2x1
jax: 0.10.0
libtpu: 0.0.40
codegen_flags: <defaults>
</compile_context>

<pallas_src>
import functools

import jax
import jax.numpy as jnp
import numpy as np
from jax import lax
from jax.experimental import pallas as pl
from jax.experimental.pallas import tpu as pltpu


# ----------------------------------------------------------------------------
# helpers
# ----------------------------------------------------------------------------
def _round_up(n, m):
    return ((n + m - 1) // m) * m


def _vmem_budget_bytes(frac=0.85, fallback_bytes=64 << 20):
    """Generation-aware scoped-VMEM budget: ~85% of physical per-core VMEM
    (v5e/v6e: 128 MiB, v7x: 64 MiB). Conservative fallback if the query fails."""
    try:
        cap = int(pltpu.get_tpu_info().vmem_capacity_bytes)
    except Exception:
        cap = fallback_bytes
    return int(frac * cap)


def _fused_vmem_estimate(cin_p, mid, cout_p, np_lanes, halo, mb):
    """Conservative per-grid-step VMEM estimate for the fused kernel (bytes)."""
    f = 4
    return int(
        2 * (cin_p + cout_p) * np_lanes * f            # double-buffered in/out blocks
        + 10 * np_lanes * f                            # boundary masks
        + (cin_p + mid) * (np_lanes + 2 * halo) * f    # halo-widened conv operands
        + 4 * max(cin_p, mid) * np_lanes * (f + mb)    # in-flight shifted taps (slack)
        + 2 * mid * np_lanes * (f + mb)                # h1 / h2 (+ matmul-dtype copies)
        + (mid + cout_p) * np_lanes * f                # conv accumulators
        + 6 * mid * mid * f                            # CAM temporaries
        + (2 << 20))                                   # compiler scratch headroom


def _tap_masks(H, W, np_lanes):
    """(10, Np) f32: rows 0..8 = per-tap neighbor-validity masks for the 3x3
    conv (tap order = (dy, dx) row-major), row 9 = in-image lane mask."""
    p = np.arange(np_lanes)
    yy, xx = p // W, p % W
    m = np.zeros((10, np_lanes), np.float32)
    k = 0
    for dy in (-1, 0, 1):
        for dx in (-1, 0, 1):
            m[k] = ((yy + dy >= 0) & (yy + dy < H) &
                    (xx + dx >= 0) & (xx + dx < W)).astype(np.float32)
            k += 1
    m[9] = (p < H * W).astype(np.float32)
    return m


def _bn_fold(conv_bias, bn_w, bn_b, bn_mean, bn_var, eps=1e-5):
    """Fold conv bias + inference-mode BatchNorm into a per-channel affine."""
    scale = bn_w / jnp.sqrt(bn_var + eps)
    shift = bn_b + scale * (conv_bias - bn_mean)
    return scale, shift


# ----------------------------------------------------------------------------
# fused kernel: conv1 + BN + PReLU -> CAM -> conv2 + BN + PReLU
# ----------------------------------------------------------------------------
def _fused_kernel(scal_ref, mask_ref, x_ref, w1_ref, s1_ref, t1_ref,
                  w2_ref, s2_ref, t2_ref, o_ref, *, W, matmul_dtype):
    np_lanes = x_ref.shape[-1]                     # lane-padded H*W
    halo = _round_up(W + 1, 128)                   # zero halo >= max |shift|
    in_image = mask_ref[9:10, :]                   # (1, Np) 0/1 f32

    def conv3x3(h, w_taps_ref, scale_ref, shift_ref, alpha):
        # h: (Cin, Np) f32.  Returns (Cout, Np) f32 with folded BN + PReLU and
        # the lane padding forced back to zero (so it can legally feed CAM).
        cin = h.shape[0]
        cout = w_taps_ref.shape[1]
        zpad = jnp.zeros((cin, halo), jnp.float32)
        hwide = jnp.concatenate([zpad, h, zpad], axis=-1)   # zeros outside the row
        acc = jnp.zeros((cout, np_lanes), jnp.float32)
        k = 0
        for dy in (-1, 0, 1):
            for dx in (-1, 0, 1):
                s = dy * W + dx
                g = hwide[:, halo + s: halo + s + np_lanes]     # g[:, p] = h[:, p+s]
                gm = (g * mask_ref[k:k + 1, :]).astype(matmul_dtype)
                acc = acc + jnp.dot(w_taps_ref[k], gm,
                                    preferred_element_type=jnp.float32)
                k += 1
        y = acc * scale_ref[...] + shift_ref[...]     # folded conv-bias + BatchNorm
        y = jnp.where(y >= 0.0, y, alpha * y)         # PReLU (single parameter)
        return y * in_image                           # zero the pad lanes

    alpha1 = scal_ref[0]
    gamma = scal_ref[1]
    alpha2 = scal_ref[2]

    # --- conv1 + BN + PReLU --------------------------------------------------
    h1 = conv3x3(x_ref[0], w1_ref, s1_ref, t1_ref, alpha1)         # (MID, Np) f32

    # --- CAM channel attention -----------------------------------------------
    hm = h1.astype(matmul_dtype)
    # energy = H @ H^T, contracting the shared lane (HW) axis (no transpose).
    energy = jnp.einsum("cn,dn->cd", hm, hm,
                        preferred_element_type=jnp.float32)        # (MID, MID)
    # softmax(rowmax(E) - E) == exp(rowmin(E) - E) / sum(...)  -> one reduction.
    num = jnp.exp(jnp.min(energy, axis=-1, keepdims=True) - energy)
    inv = pl.reciprocal(jnp.sum(num, axis=-1, keepdims=True), approx=True)
    attn = (num * (inv * gamma)).astype(matmul_dtype)              # gamma folded in
    h2 = jnp.dot(attn, hm, preferred_element_type=jnp.float32) + h1  # residual (f32)

    # --- conv2 + BN + PReLU --------------------------------------------------
    out = conv3x3(h2, w2_ref, s2_ref, t2_ref, alpha2)              # (Cout_p, Np)
    o_ref[0] = out.astype(o_ref.dtype)


# ----------------------------------------------------------------------------
# Conv_CAM_Layer forward (wrapper)
# ----------------------------------------------------------------------------
def conv_cam_layer(x, params, matmul_dtype=jnp.bfloat16):
    """Forward pass of Conv_CAM_Layer (inference-mode BatchNorm folding)."""
    B, cin, H, W = x.shape
    mid = params["w1"].shape[0]                     # 32 in the module
    cout = params["w2"].shape[0]
    n = H * W
    np_lanes = _round_up(n, 128)
    cin_p = _round_up(cin, 8)
    cout_p = _round_up(cout, 8)
    halo = _round_up(W + 1, 128)
    mb = np.dtype(matmul_dtype).itemsize

    budget = _vmem_budget_bytes()
    need = _fused_vmem_estimate(cin_p, mid, cout_p, np_lanes, halo, mb)
    if need > budget:
        # TODO(synk): spatially-tiled fused kernel (halo-exchanged Np tiles +
        # two-pass CAM) for activation slabs too large for per-core VMEM.
        return conv_cam_layer_reference(x, params, operand_dtype=jnp.float32)

    s1, t1 = _bn_fold(params["b1"], params["bn1_w"], params["bn1_b"],
                      params["bn1_mean"], params["bn1_var"])
    s2, t2 = _bn_fold(params["b2"], params["bn2_w"], params["bn2_b"],
                      params["bn2_mean"], params["bn2_var"])

    # Flatten + channel/lane pad the input ONCE; everything below stays in the
    # padded (C, Np) layout until the single final slice.
    xf = jnp.pad(x.reshape(B, cin, n),
                 ((0, 0), (0, cin_p - cin), (0, np_lanes - n)))

    # Tap-major weights (9, Cout, Cin), cast to the MXU operand dtype once.
    w1 = jnp.pad(params["w1"], ((0, 0), (0, cin_p - cin), (0, 0), (0, 0)))
    w1_t = jnp.transpose(w1, (2, 3, 0, 1)).reshape(9, mid, cin_p).astype(matmul_dtype)
    w2 = jnp.pad(params["w2"], ((0, cout_p - cout), (0, 0), (0, 0), (0, 0)))
    w2_t = jnp.transpose(w2, (2, 3, 0, 1)).reshape(9, cout_p, mid).astype(matmul_dtype)

    s1c = s1.reshape(mid, 1)
    t1c = t1.reshape(mid, 1)
    s2c = jnp.pad(s2, (0, cout_p - cout)).reshape(cout_p, 1)
    t2c = jnp.pad(t2, (0, cout_p - cout)).reshape(cout_p, 1)

    scalars = jnp.concatenate([params["alpha1"].reshape(1).astype(jnp.float32),
                               params["gamma"].reshape(1).astype(jnp.float32),
                               params["alpha2"].reshape(1).astype(jnp.float32)])

    masks = jnp.asarray(_tap_masks(H, W, np_lanes))            # (10, Np) f32

    out = pl.pallas_call(
        functools.partial(_fused_kernel, W=W, matmul_dtype=matmul_dtype),
        out_shape=jax.ShapeDtypeStruct((B, cout_p, np_lanes), x.dtype),
        grid_spec=pl.GridSpec(
            grid=(B,),
            in_specs=[
                pl.BlockSpec(memory_space=pltpu.MemorySpace.SMEM),       # alpha1, gamma, alpha2
                pl.BlockSpec((10, np_lanes), lambda b: (0, 0)),          # boundary masks
                pl.BlockSpec((1, cin_p, np_lanes), lambda b: (b, 0, 0)), # input slab
                pl.BlockSpec((9, mid, cin_p), lambda b: (0, 0, 0)),      # conv1 taps
                pl.BlockSpec((mid, 1), lambda b: (0, 0)),                # BN1 scale
                pl.BlockSpec((mid, 1), lambda b: (0, 0)),                # BN1 shift
                pl.BlockSpec((9, cout_p, mid), lambda b: (0, 0, 0)),     # conv2 taps
                pl.BlockSpec((cout_p, 1), lambda b: (0, 0)),             # BN2 scale
                pl.BlockSpec((cout_p, 1), lambda b: (0, 0)),             # BN2 shift
            ],
            out_specs=pl.BlockSpec((1, cout_p, np_lanes), lambda b: (b, 0, 0)),
        ),
        compiler_params=pltpu.CompilerParams(
            dimension_semantics=("parallel",),
            vmem_limit_bytes=budget),
    )(scalars, masks, xf, w1_t, s1c, t1c, w2_t, s2c, t2c)

    # Single slice/reshape at the very end.
    return out[:, :cout, :n].reshape(B, cout, H, W)


# ----------------------------------------------------------------------------
# pure-JAX references (also used as the too-big-for-VMEM fallback)
# ----------------------------------------------------------------------------
def _conv_bn_prelu_ref(x, w, b, bn_w, bn_b, bn_mean, bn_var, alpha,
                       operand_dtype=jnp.float32, eps=1e-5):
    # operand_dtype=bf16 mirrors the kernel's bf16-operand / f32-accumulate conv.
    xo = x.astype(operand_dtype).astype(jnp.float32)
    wo = w.astype(operand_dtype).astype(jnp.float32)
    y = lax.conv_general_dilated(
        xo, wo, window_strides=(1, 1), padding=((1, 1), (1, 1)),
        dimension_numbers=("NCHW", "OIHW", "NCHW"),
        precision=lax.Precision.HIGHEST)
    y = y + b[None, :, None, None]
    scale = (bn_w / jnp.sqrt(bn_var + eps))[None, :, None, None]
    y = (y - bn_mean[None, :, None, None]) * scale + bn_b[None, :, None, None]
    return jnp.where(y >= 0, y, alpha[0] * y)


def _cam_ref_f32(xf, gamma):
    # Literal translation of CAM_Module.forward (f32 throughout).
    energy = jnp.einsum("bcn,bdn->bcd", xf, xf, precision=lax.Precision.HIGHEST)
    energy_new = jnp.max(energy, axis=-1, keepdims=True) - energy
    attn = jax.nn.softmax(energy_new, axis=-1)
    out = jnp.einsum("bcd,bdn->bcn", attn, xf, precision=lax.Precision.HIGHEST)
    return gamma * out + xf


def _cam_ref_matched(xf, gamma, md):
    # Mirrors the kernel's reduced-precision CAM numerics (md operands, f32 acc).
    xm = xf.astype(md)
    energy = jnp.einsum("bcn,bdn->bcd", xm, xm, preferred_element_type=jnp.float32)
    num = jnp.exp(jnp.min(energy, axis=-1, keepdims=True) - energy)
    attn = num / jnp.sum(num, axis=-1, keepdims=True)
    attn = (gamma * attn).astype(md)
    out = jnp.einsum("bcd,bdn->bcn", attn, xm, preferred_element_type=jnp.float32)
    return out + xf


def conv_cam_layer_reference(x, params, operand_dtype=jnp.float32):
    h = _conv_bn_prelu_ref(x, params["w1"], params["b1"], params["bn1_w"],
                           params["bn1_b"], params["bn1_mean"], params["bn1_var"],
                           params["alpha1"], operand_dtype)
    B, C, H, W = h.shape
    hf = h.reshape(B, C, H * W)
    if operand_dtype == jnp.float32:
        hf = _cam_ref_f32(hf, params["gamma"][0])
    else:
        hf = _cam_ref_matched(hf, params["gamma"][0], operand_dtype)
    h = hf.reshape(B, C, H, W)
    return _conv_bn_prelu_ref(h, params["w2"], params["b2"], params["bn2_w"],
                              params["bn2_b"], params["bn2_mean"], params["bn2_var"],
                              params["alpha2"], operand_dtype)


# ----------------------------------------------------------------------------
# self-test
# ----------------------------------------------------------------------------
if __name__ == "__main__":
    B, in_ch, out_in, H, W = 2, 4, 4, 16, 16
    MID = 32  # Conv_CAM_Layer hard-codes 32 channels before/inside CAM_Module

    keys = jax.random.split(jax.random.PRNGKey(0), 13)
    x = jax.random.normal(keys[0], (B, in_ch, H, W), dtype=jnp.float32)

    params = {
        "w1": jax.random.normal(keys[1], (MID, in_ch, 3, 3), jnp.float32)
              / float(np.sqrt(9 * in_ch)),
        "b1": 0.1 * jax.random.normal(keys[2], (MID,), jnp.float32),
        "bn1_w": 1.0 + 0.1 * jax.random.normal(keys[3], (MID,), jnp.float32),
        "bn1_b": 0.1 * jax.random.normal(keys[4], (MID,), jnp.float32),
        "bn1_mean": 0.1 * jax.random.normal(keys[5], (MID,), jnp.float32),
        "bn1_var": 1.0 + 0.2 * jax.random.uniform(keys[6], (MID,), jnp.float32),
        "alpha1": jnp.array([0.25], jnp.float32),     # PReLU default init
        # Module inits gamma = zeros(1); use a NONZERO value here so the
        # attention path is actually exercised by the test.
        "gamma": jnp.array([0.75], jnp.float32),
        "w2": jax.random.normal(keys[7], (out_in, MID, 3, 3), jnp.float32)
              / float(np.sqrt(9 * MID)),
        "b2": 0.1 * jax.random.normal(keys[8], (out_in,), jnp.float32),
        "bn2_w": 1.0 + 0.1 * jax.random.normal(keys[9], (out_in,), jnp.float32),
        "bn2_b": 0.1 * jax.random.normal(keys[10], (out_in,), jnp.float32),
        "bn2_mean": 0.1 * jax.random.normal(keys[11], (out_in,), jnp.float32),
        "bn2_var": 1.0 + 0.2 * jax.random.uniform(keys[12], (out_in,), jnp.float32),
        "alpha2": jnp.array([0.25], jnp.float32),
    }

    fwd_fast = jax.jit(functools.partial(conv_cam_layer, matmul_dtype=jnp.bfloat16))
    fwd_f32 = jax.jit(functools.partial(conv_cam_layer, matmul_dtype=jnp.float32))

    out_fast = jax.block_until_ready(fwd_fast(x, params))
    out_f32 = jax.block_until_ready(fwd_f32(x, params))

    ref_f32 = conv_cam_layer_reference(x, params, operand_dtype=jnp.float32)
    ref_bf16 = conv_cam_layer_reference(x, params, operand_dtype=jnp.bfloat16)

    # f32-operand kernel path vs. literal module math (tight semantics check).
    np.testing.assert_allclose(np.asarray(out_f32), np.asarray(ref_f32),
                               rtol=5e-3, atol=5e-3)
    # bf16-MXU fast path vs. numerics-matched reference (bf16-level tolerance;
    # bf16 operands deviate from the f32 PyTorch reference by design).
    np.testing.assert_allclose(np.asarray(out_fast), np.asarray(ref_bf16),
                               rtol=2e-2, atol=2e-2)

    print("KERNEL_OK")
</pallas_src>

<mosaic_0001>
module attributes {stable_mosaic.version = 11 : i64} {
  func.func @_fused_kernel(%arg0: i32, %arg1: memref<3xf32, #tpu.memory_space<smem>>, %arg2: memref<10x256xf32, #tpu.memory_space<vmem>>, %arg3: memref<1x8x256xf32, #tpu.memory_space<vmem>>, %arg4: memref<9x32x8xbf16, #tpu.memory_space<vmem>>, %arg5: memref<32x1xf32, #tpu.memory_space<vmem>>, %arg6: memref<32x1xf32, #tpu.memory_space<vmem>>, %arg7: memref<9x8x32xbf16, #tpu.memory_space<vmem>>, %arg8: memref<8x1xf32, #tpu.memory_space<vmem>>, %arg9: memref<8x1xf32, #tpu.memory_space<vmem>>, %arg10: memref<1x8x256xf32, #tpu.memory_space<vmem>>) attributes {dimension_semantics = [#tpu.dimension_semantics<parallel>], iteration_bounds = array<i64: 2>, scalar_prefetch = 0 : i64, scratch_operands = 0 : i64, tpu.core_type = #tpu.core_type<tc>, window_params = [{transform_indices = @transform_0, window_bounds = array<i64: 3>}, {pipeline_mode = #tpu.pipeline_mode<synchronous>, transform_indices = @transform_1, window_bounds = array<i64: 10, 256>}, {transform_indices = @transform_2, window_bounds = array<i64: 1, 8, 256>}, {pipeline_mode = #tpu.pipeline_mode<synchronous>, transform_indices = @transform_3, window_bounds = array<i64: 9, 32, 8>}, {pipeline_mode = #tpu.pipeline_mode<synchronous>, transform_indices = @transform_4, window_bounds = array<i64: 32, 1>}, {pipeline_mode = #tpu.pipeline_mode<synchronous>, transform_indices = @transform_5, window_bounds = array<i64: 32, 1>}, {pipeline_mode = #tpu.pipeline_mode<synchronous>, transform_indices = @transform_6, window_bounds = array<i64: 9, 8, 32>}, {pipeline_mode = #tpu.pipeline_mode<synchronous>, transform_indices = @transform_7, window_bounds = array<i64: 8, 1>}, {pipeline_mode = #tpu.pipeline_mode<synchronous>, transform_indices = @transform_8, window_bounds = array<i64: 8, 1>}, {transform_indices = @transform_9, window_bounds = array<i64: 1, 8, 256>}]} {
    %c9 = arith.constant 9 : index
    %c0 = arith.constant 0 : index
    %0 = vector.load %arg2[%c9, %c0] : memref<10x256xf32, #tpu.memory_space<vmem>>, vector<1x256xf32>
    %c0_0 = arith.constant 0 : index
    %1 = memref.load %arg1[%c0_0] : memref<3xf32, #tpu.memory_space<smem>>
    %c1 = arith.constant 1 : index
    %2 = memref.load %arg1[%c1] : memref<3xf32, #tpu.memory_space<smem>>
    %c2 = arith.constant 2 : index
    %3 = memref.load %arg1[%c2] : memref<3xf32, #tpu.memory_space<smem>>
    %c0_1 = arith.constant 0 : index
    %c0_2 = arith.constant 0 : index
    %c0_3 = arith.constant 0 : index
    %4 = vector.load %arg3[%c0_1, %c0_2, %c0_3] : memref<1x8x256xf32, #tpu.memory_space<vmem>>, vector<1x8x256xf32>
    %5 = vector.shape_cast %4 : vector<1x8x256xf32> to vector<8x256xf32>
    %cst = arith.constant 0.000000e+00 : f32
    %6 = vector.broadcast %cst : f32 to vector<8x128xf32>
    %7 = tpu.concatenate %6, %5, %6 in 1 : vector<8x128xf32>, vector<8x256xf32>, vector<8x128xf32> -> vector<8x512xf32>
    %cst_4 = arith.constant 0.000000e+00 : f32
    %8 = vector.broadcast %cst_4 : f32 to vector<32x256xf32>
    %9 = vector.extract_strided_slice %7 {offsets = [0, 111], sizes = [8, 256], strides = [1, 1]} : vector<8x512xf32> to vector<8x256xf32>
    %c0_5 = arith.constant 0 : index
    %c0_6 = arith.constant 0 : index
    %10 = vector.load %arg2[%c0_5, %c0_6] : memref<10x256xf32, #tpu.memory_space<vmem>>, vector<1x256xf32>
    %11 = vector.broadcast %10 : vector<1x256xf32> to vector<8x256xf32>
    %12 = arith.mulf %9, %11 : vector<8x256xf32>
    %13 = arith.truncf %12 : vector<8x256xf32> to vector<8x256xbf16>
    %c0_7 = arith.constant 0 : index
    %c0_8 = arith.constant 0 : index
    %c0_9 = arith.constant 0 : index
    %14 = vector.load %arg4[%c0_7, %c0_8, %c0_9] : memref<9x32x8xbf16, #tpu.memory_space<vmem>>, vector<1x32x8xbf16>
    %15 = vector.shape_cast %14 : vector<1x32x8xbf16> to vector<32x8xbf16>
    %cst_10 = arith.constant dense<0.000000e+00> : vector<32x256xf32>
    %16 = tpu.matmul %15, %13, %cst_10 {dimension_numbers = #tpu.dot_dimension_numbers<[1], [0], [0], [1], [0, 0, 1, 1], [], []>} : vector<32x8xbf16>, vector<8x256xbf16>, vector<32x256xf32> -> vector<32x256xf32>
    %17 = arith.addf %8, %16 : vector<32x256xf32>
    %18 = vector.extract_strided_slice %7 {offsets = [0, 112], sizes = [8, 256], strides = [1, 1]} : vector<8x512xf32> to vector<8x256xf32>
    %c1_11 = arith.constant 1 : index
    %c0_12 = arith.constant 0 : index
    %19 = vector.load %arg2[%c1_11, %c0_12] : memref<10x256xf32, #tpu.memory_space<vmem>>, vector<1x256xf32>
    %20 = vector.broadcast %19 : vector<1x256xf32> to vector<8x256xf32>
    %21 = arith.mulf %18, %20 : vector<8x256xf32>
    %22 = arith.truncf %21 : vector<8x256xf32> to vector<8x256xbf16>
    %c1_13 = arith.constant 1 : index
    %c0_14 = arith.constant 0 : index
    %c0_15 = arith.constant 0 : index
    %23 = vector.load %arg4[%c1_13, %c0_14, %c0_15] : memref<9x32x8xbf16, #tpu.memory_space<vmem>>, vector<1x32x8xbf16>
    %24 = vector.shape_cast %23 : vector<1x32x8xbf16> to vector<32x8xbf16>
    %cst_16 = arith.constant dense<0.000000e+00> : vector<32x256xf32>
    %25 = tpu.matmul %24, %22, %cst_16 {dimension_numbers = #tpu.dot_dimension_numbers<[1], [0], [0], [1], [0, 0, 1, 1], [], []>} : vector<32x8xbf16>, vector<8x256xbf16>, vector<32x256xf32> -> vector<32x256xf32>
    %26 = arith.addf %17, %25 : vector<32x256xf32>
    %27 = vector.extract_strided_slice %7 {offsets = [0, 113], sizes = [8, 256], strides = [1, 1]} : vector<8x512xf32> to vector<8x256xf32>
    %c2_17 = arith.constant 2 : index
    %c0_18 = arith.constant 0 : index
    %28 = vector.load %arg2[%c2_17, %c0_18] : memref<10x256xf32, #tpu.memory_space<vmem>>, vector<1x256xf32>
    %29 = vector.broadcast %28 : vector<1x256xf32> to vector<8x256xf32>
    %30 = arith.mulf %27, %29 : vector<8x256xf32>
    %31 = arith.truncf %30 : vector<8x256xf32> to vector<8x256xbf16>
    %c2_19 = arith.constant 2 : index
    %c0_20 = arith.constant 0 : index
    %c0_21 = arith.constant 0 : index
    %32 = vector.load %arg4[%c2_19, %c0_20, %c0_21] : memref<9x32x8xbf16, #tpu.memory_space<vmem>>, vector<1x32x8xbf16>
    %33 = vector.shape_cast %32 : vector<1x32x8xbf16> to vector<32x8xbf16>
    %cst_22 = arith.constant dense<0.000000e+00> : vector<32x256xf32>
    %34 = tpu.matmul %33, %31, %cst_22 {dimension_numbers = #tpu.dot_dimension_numbers<[1], [0], [0], [1], [0, 0, 1, 1], [], []>} : vector<32x8xbf16>, vector<8x256xbf16>, vector<32x256xf32> -> vector<32x256xf32>
    %35 = arith.addf %26, %34 : vector<32x256xf32>
    %36 = vector.extract_strided_slice %7 {offsets = [0, 127], sizes = [8, 256], strides = [1, 1]} : vector<8x512xf32> to vector<8x256xf32>
    %c3 = arith.constant 3 : index
    %c0_23 = arith.constant 0 : index
    %37 = vector.load %arg2[%c3, %c0_23] : memref<10x256xf32, #tpu.memory_space<vmem>>, vector<1x256xf32>
    %38 = vector.broadcast %37 : vector<1x256xf32> to vector<8x256xf32>
    %39 = arith.mulf %36, %38 : vector<8x256xf32>
    %40 = arith.truncf %39 : vector<8x256xf32> to vector<8x256xbf16>
    %c3_24 = arith.constant 3 : index
    %c0_25 = arith.constant 0 : index
    %c0_26 = arith.constant 0 : index
    %41 = vector.load %arg4[%c3_24, %c0_25, %c0_26] : memref<9x32x8xbf16, #tpu.memory_space<vmem>>, vector<1x32x8xbf16>
    %42 = vector.shape_cast %41 : vector<1x32x8xbf16> to vector<32x8xbf16>
    %cst_27 = arith.constant dense<0.000000e+00> : vector<32x256xf32>
    %43 = tpu.matmul %42, %40, %cst_27 {dimension_numbers = #tpu.dot_dimension_numbers<[1], [0], [0], [1], [0, 0, 1, 1], [], []>} : vector<32x8xbf16>, vector<8x256xbf16>, vector<32x256xf32> -> vector<32x256xf32>
    %44 = arith.addf %35, %43 : vector<32x256xf32>
    %45 = vector.extract_strided_slice %7 {offsets = [0, 128], sizes = [8, 256], strides = [1, 1]} : vector<8x512xf32> to vector<8x256xf32>
    %c4 = arith.constant 4 : index
    %c0_28 = arith.constant 0 : index
    %46 = vector.load %arg2[%c4, %c0_28] : memref<10x256xf32, #tpu.memory_space<vmem>>, vector<1x256xf32>
    %47 = vector.broadcast %46 : vector<1x256xf32> to vector<8x256xf32>
    %48 = arith.mulf %45, %47 : vector<8x256xf32>
    %49 = arith.truncf %48 : vector<8x256xf32> to vector<8x256xbf16>
    %c4_29 = arith.constant 4 : index
    %c0_30 = arith.constant 0 : index
    %c0_31 = arith.constant 0 : index
    %50 = vector.load %arg4[%c4_29, %c0_30, %c0_31] : memref<9x32x8xbf16, #tpu.memory_space<vmem>>, vector<1x32x8xbf16>
    %51 = vector.shape_cast %50 : vector<1x32x8xbf16> to vector<32x8xbf16>
    %cst_32 = arith.constant dense<0.000000e+00> : vector<32x256xf32>
    %52 = tpu.matmul %51, %49, %cst_32 {dimension_numbers = #tpu.dot_dimension_numbers<[1], [0], [0], [1], [0, 0, 1, 1], [], []>} : vector<32x8xbf16>, vector<8x256xbf16>, vector<32x256xf32> -> vector<32x256xf32>
    %53 = arith.addf %44, %52 : vector<32x256xf32>
    %54 = vector.extract_strided_slice %7 {offsets = [0, 129], sizes = [8, 256], strides = [1, 1]} : vector<8x512xf32> to vector<8x256xf32>
    %c5 = arith.constant 5 : index
    %c0_33 = arith.constant 0 : index
    %55 = vector.load %arg2[%c5, %c0_33] : memref<10x256xf32, #tpu.memory_space<vmem>>, vector<1x256xf32>
    %56 = vector.broadcast %55 : vector<1x256xf32> to vector<8x256xf32>
    %57 = arith.mulf %54, %56 : vector<8x256xf32>
    %58 = arith.truncf %57 : vector<8x256xf32> to vector<8x256xbf16>
    %c5_34 = arith.constant 5 : index
    %c0_35 = arith.constant 0 : index
    %c0_36 = arith.constant 0 : index
    %59 = vector.load %arg4[%c5_34, %c0_35, %c0_36] : memref<9x32x8xbf16, #tpu.memory_space<vmem>>, vector<1x32x8xbf16>
    %60 = vector.shape_cast %59 : vector<1x32x8xbf16> to vector<32x8xbf16>
    %cst_37 = arith.constant dense<0.000000e+00> : vector<32x256xf32>
    %61 = tpu.matmul %60, %58, %cst_37 {dimension_numbers = #tpu.dot_dimension_numbers<[1], [0], [0], [1], [0, 0, 1, 1], [], []>} : vector<32x8xbf16>, vector<8x256xbf16>, vector<32x256xf32> -> vector<32x256xf32>
    %62 = arith.addf %53, %61 : vector<32x256xf32>
    %63 = vector.extract_strided_slice %7 {offsets = [0, 143], sizes = [8, 256], strides = [1, 1]} : vector<8x512xf32> to vector<8x256xf32>
    %c6 = arith.constant 6 : index
    %c0_38 = arith.constant 0 : index
    %64 = vector.load %arg2[%c6, %c0_38] : memref<10x256xf32, #tpu.memory_space<vmem>>, vector<1x256xf32>
    %65 = vector.broadcast %64 : vector<1x256xf32> to vector<8x256xf32>
    %66 = arith.mulf %63, %65 : vector<8x256xf32>
    %67 = arith.truncf %66 : vector<8x256xf32> to vector<8x256xbf16>
    %c6_39 = arith.constant 6 : index
    %c0_40 = arith.constant 0 : index
    %c0_41 = arith.constant 0 : index
    %68 = vector.load %arg4[%c6_39, %c0_40, %c0_41] : memref<9x32x8xbf16, #tpu.memory_space<vmem>>, vector<1x32x8xbf16>
    %69 = vector.shape_cast %68 : vector<1x32x8xbf16> to vector<32x8xbf16>
    %cst_42 = arith.constant dense<0.000000e+00> : vector<32x256xf32>
    %70 = tpu.matmul %69, %67, %cst_42 {dimension_numbers = #tpu.dot_dimension_numbers<[1], [0], [0], [1], [0, 0, 1, 1], [], []>} : vector<32x8xbf16>, vector<8x256xbf16>, vector<32x256xf32> -> vector<32x256xf32>
    %71 = arith.addf %62, %70 : vector<32x256xf32>
    %72 = vector.extract_strided_slice %7 {offsets = [0, 144], sizes = [8, 256], strides = [1, 1]} : vector<8x512xf32> to vector<8x256xf32>
    %c7 = arith.constant 7 : index
    %c0_43 = arith.constant 0 : index
    %73 = vector.load %arg2[%c7, %c0_43] : memref<10x256xf32, #tpu.memory_space<vmem>>, vector<1x256xf32>
    %74 = vector.broadcast %73 : vector<1x256xf32> to vector<8x256xf32>
    %75 = arith.mulf %72, %74 : vector<8x256xf32>
    %76 = arith.truncf %75 : vector<8x256xf32> to vector<8x256xbf16>
    %c7_44 = arith.constant 7 : index
    %c0_45 = arith.constant 0 : index
    %c0_46 = arith.constant 0 : index
    %77 = vector.load %arg4[%c7_44, %c0_45, %c0_46] : memref<9x32x8xbf16, #tpu.memory_space<vmem>>, vector<1x32x8xbf16>
    %78 = vector.shape_cast %77 : vector<1x32x8xbf16> to vector<32x8xbf16>
    %cst_47 = arith.constant dense<0.000000e+00> : vector<32x256xf32>
    %79 = tpu.matmul %78, %76, %cst_47 {dimension_numbers = #tpu.dot_dimension_numbers<[1], [0], [0], [1], [0, 0, 1, 1], [], []>} : vector<32x8xbf16>, vector<8x256xbf16>, vector<32x256xf32> -> vector<32x256xf32>
    %80 = arith.addf %71, %79 : vector<32x256xf32>
    %81 = vector.extract_strided_slice %7 {offsets = [0, 145], sizes = [8, 256], strides = [1, 1]} : vector<8x512xf32> to vector<8x256xf32>
    %c8 = arith.constant 8 : index
    %c0_48 = arith.constant 0 : index
    %82 = vector.load %arg2[%c8, %c0_48] : memref<10x256xf32, #tpu.memory_space<vmem>>, vector<1x256xf32>
    %83 = vector.broadcast %82 : vector<1x256xf32> to vector<8x256xf32>
    %84 = arith.mulf %81, %83 : vector<8x256xf32>
    %85 = arith.truncf %84 : vector<8x256xf32> to vector<8x256xbf16>
    %c8_49 = arith.constant 8 : index
    %c0_50 = arith.constant 0 : index
    %c0_51 = arith.constant 0 : index
    %86 = vector.load %arg4[%c8_49, %c0_50, %c0_51] : memref<9x32x8xbf16, #tpu.memory_space<vmem>>, vector<1x32x8xbf16>
    %87 = vector.shape_cast %86 : vector<1x32x8xbf16> to vector<32x8xbf16>
    %cst_52 = arith.constant dense<0.000000e+00> : vector<32x256xf32>
    %88 = tpu.matmul %87, %85, %cst_52 {dimension_numbers = #tpu.dot_dimension_numbers<[1], [0], [0], [1], [0, 0, 1, 1], [], []>} : vector<32x8xbf16>, vector<8x256xbf16>, vector<32x256xf32> -> vector<32x256xf32>
    %89 = arith.addf %80, %88 : vector<32x256xf32>
    %c0_53 = arith.constant 0 : index
    %c0_54 = arith.constant 0 : index
    %90 = vector.load %arg5[%c0_53, %c0_54] : memref<32x1xf32, #tpu.memory_space<vmem>>, vector<32x1xf32>
    %91 = vector.broadcast %90 : vector<32x1xf32> to vector<32x256xf32>
    %92 = arith.mulf %89, %91 : vector<32x256xf32>
    %c0_55 = arith.constant 0 : index
    %c0_56 = arith.constant 0 : index
    %93 = vector.load %arg6[%c0_55, %c0_56] : memref<32x1xf32, #tpu.memory_space<vmem>>, vector<32x1xf32>
    %94 = vector.broadcast %93 : vector<32x1xf32> to vector<32x256xf32>
    %95 = arith.addf %92, %94 : vector<32x256xf32>
    %cst_57 = arith.constant 0.000000e+00 : f32
    %96 = vector.broadcast %cst_57 : f32 to vector<32x256xf32>
    %97 = arith.cmpf oge, %95, %96 : vector<32x256xf32>
    %98 = vector.broadcast %1 : f32 to vector<32x256xf32>
    %99 = arith.mulf %98, %95 : vector<32x256xf32>
    %100 = arith.select %97, %95, %99 : vector<32x256xi1>, vector<32x256xf32>
    %101 = vector.broadcast %0 : vector<1x256xf32> to vector<32x256xf32>
    %102 = arith.mulf %100, %101 : vector<32x256xf32>
    %103 = arith.truncf %102 : vector<32x256xf32> to vector<32x256xbf16>
    "tpu.trace_start"() <{level = 10 : i32, message = "cn,dn->cd"}> : () -> ()
    %cst_58 = arith.constant dense<0.000000e+00> : vector<32x32xf32>
    %104 = tpu.matmul %103, %103, %cst_58 {dimension_numbers = #tpu.dot_dimension_numbers<[1], [1], [0], [0], [0, 0, 1, 0], [], []>} : vector<32x256xbf16>, vector<32x256xbf16>, vector<32x32xf32> -> vector<32x32xf32>
    "tpu.trace_stop"() : () -> ()
    %cst_59 = arith.constant dense<0x7F800000> : vector<32xf32>
    %105 = vector.multi_reduction <minimumf>, %104, %cst_59 [1] : vector<32x32xf32> to vector<32xf32>
    %106 = vector.shape_cast %105 : vector<32xf32> to vector<32x1xf32>
    %107 = vector.broadcast %106 : vector<32x1xf32> to vector<32x32xf32>
    %108 = arith.subf %107, %104 : vector<32x32xf32>
    %109 = math.exp %108 : vector<32x32xf32>
    %cst_60 = arith.constant dense<0.000000e+00> : vector<32xf32>
    %110 = vector.multi_reduction <add>, %109, %cst_60 [1] : vector<32x32xf32> to vector<32xf32>
    %111 = vector.shape_cast %110 : vector<32xf32> to vector<32x1xf32>
    %112 = tpu.reciprocal %111 {approx = true} : vector<32x1xf32> -> vector<32x1xf32>
    %113 = vector.broadcast %2 : f32 to vector<32x1xf32>
    %114 = arith.mulf %112, %113 : vector<32x1xf32>
    %115 = vector.broadcast %114 : vector<32x1xf32> to vector<32x32xf32>
    %116 = arith.mulf %109, %115 : vector<32x32xf32>
    %117 = arith.truncf %116 : vector<32x32xf32> to vector<32x32xbf16>
    %cst_61 = arith.constant dense<0.000000e+00> : vector<32x256xf32>
    %118 = tpu.matmul %117, %103, %cst_61 {dimension_numbers = #tpu.dot_dimension_numbers<[1], [0], [0], [1], [0, 0, 1, 1], [], []>} : vector<32x32xbf16>, vector<32x256xbf16>, vector<32x256xf32> -> vector<32x256xf32>
    %119 = arith.addf %118, %102 : vector<32x256xf32>
    %cst_62 = arith.constant 0.000000e+00 : f32
    %120 = vector.broadcast %cst_62 : f32 to vector<32x128xf32>
    %121 = tpu.concatenate %120, %119, %120 in 1 : vector<32x128xf32>, vector<32x256xf32>, vector<32x128xf32> -> vector<32x512xf32>
    %cst_63 = arith.constant 0.000000e+00 : f32
    %122 = vector.broadcast %cst_63 : f32 to vector<8x256xf32>
    %123 = vector.extract_strided_slice %121 {offsets = [0, 111], sizes = [32, 256], strides = [1, 1]} : vector<32x512xf32> to vector<32x256xf32>
    %c0_64 = arith.constant 0 : index
    %c0_65 = arith.constant 0 : index
    %124 = vector.load %arg2[%c0_64, %c0_65] : memref<10x256xf32, #tpu.memory_space<vmem>>, vector<1x256xf32>
    %125 = vector.broadcast %124 : vector<1x256xf32> to vector<32x256xf32>
    %126 = arith.mulf %123, %125 : vector<32x256xf32>
    %127 = arith.truncf %126 : vector<32x256xf32> to vector<32x256xbf16>
    %c0_66 = arith.constant 0 : index
    %c0_67 = arith.constant 0 : index
    %c0_68 = arith.constant 0 : index
    %128 = vector.load %arg7[%c0_66, %c0_67, %c0_68] : memref<9x8x32xbf16, #tpu.memory_space<vmem>>, vector<1x8x32xbf16>
    %129 = vector.shape_cast %128 : vector<1x8x32xbf16> to vector<8x32xbf16>
    %cst_69 = arith.constant dense<0.000000e+00> : vector<8x256xf32>
    %130 = tpu.matmul %129, %127, %cst_69 {dimension_numbers = #tpu.dot_dimension_numbers<[1], [0], [0], [1], [0, 0, 1, 1], [], []>} : vector<8x32xbf16>, vector<32x256xbf16>, vector<8x256xf32> -> vector<8x256xf32>
    %131 = arith.addf %122, %130 : vector<8x256xf32>
    %132 = vector.extract_strided_slice %121 {offsets = [0, 112], sizes = [32, 256], strides = [1, 1]} : vector<32x512xf32> to vector<32x256xf32>
    %c1_70 = arith.constant 1 : index
    %c0_71 = arith.constant 0 : index
    %133 = vector.load %arg2[%c1_70, %c0_71] : memref<10x256xf32, #tpu.memory_space<vmem>>, vector<1x256xf32>
    %134 = vector.broadcast %133 : vector<1x256xf32> to vector<32x256xf32>
    %135 = arith.mulf %132, %134 : vector<32x256xf32>
    %136 = arith.truncf %135 : vector<32x256xf32> to vector<32x256xbf16>
    %c1_72 = arith.constant 1 : index
    %c0_73 = arith.constant 0 : index
    %c0_74 = arith.constant 0 : index
    %137 = vector.load %arg7[%c1_72, %c0_73, %c0_74] : memref<9x8x32xbf16, #tpu.memory_space<vmem>>, vector<1x8x32xbf16>
    %138 = vector.shape_cast %137 : vector<1x8x32xbf16> to vector<8x32xbf16>
    %cst_75 = arith.constant dense<0.000000e+00> : vector<8x256xf32>
    %139 = tpu.matmul %138, %136, %cst_75 {dimension_numbers = #tpu.dot_dimension_numbers<[1], [0], [0], [1], [0, 0, 1, 1], [], []>} : vector<8x32xbf16>, vector<32x256xbf16>, vector<8x256xf32> -> vector<8x256xf32>
    %140 = arith.addf %131, %139 : vector<8x256xf32>
    %141 = vector.extract_strided_slice %121 {offsets = [0, 113], sizes = [32, 256], strides = [1, 1]} : vector<32x512xf32> to vector<32x256xf32>
    %c2_76 = arith.constant 2 : index
    %c0_77 = arith.constant 0 : index
    %142 = vector.load %arg2[%c2_76, %c0_77] : memref<10x256xf32, #tpu.memory_space<vmem>>, vector<1x256xf32>
    %143 = vector.broadcast %142 : vector<1x256xf32> to vector<32x256xf32>
    %144 = arith.mulf %141, %143 : vector<32x256xf32>
    %145 = arith.truncf %144 : vector<32x256xf32> to vector<32x256xbf16>
    %c2_78 = arith.constant 2 : index
    %c0_79 = arith.constant 0 : index
    %c0_80 = arith.constant 0 : index
    %146 = vector.load %arg7[%c2_78, %c0_79, %c0_80] : memref<9x8x32xbf16, #tpu.memory_space<vmem>>, vector<1x8x32xbf16>
    %147 = vector.shape_cast %146 : vector<1x8x32xbf16> to vector<8x32xbf16>
    %cst_81 = arith.constant dense<0.000000e+00> : vector<8x256xf32>
    %148 = tpu.matmul %147, %145, %cst_81 {dimension_numbers = #tpu.dot_dimension_numbers<[1], [0], [0], [1], [0, 0, 1, 1], [], []>} : vector<8x32xbf16>, vector<32x256xbf16>, vector<8x256xf32> -> vector<8x256xf32>
    %149 = arith.addf %140, %148 : vector<8x256xf32>
    %150 = vector.extract_strided_slice %121 {offsets = [0, 127], sizes = [32, 256], strides = [1, 1]} : vector<32x512xf32> to vector<32x256xf32>
    %c3_82 = arith.constant 3 : index
    %c0_83 = arith.constant 0 : index
    %151 = vector.load %arg2[%c3_82, %c0_83] : memref<10x256xf32, #tpu.memory_space<vmem>>, vector<1x256xf32>
    %152 = vector.broadcast %151 : vector<1x256xf32> to vector<32x256xf32>
    %153 = arith.mulf %150, %152 : vector<32x256xf32>
    %154 = arith.truncf %153 : vector<32x256xf32> to vector<32x256xbf16>
    %c3_84 = arith.constant 3 : index
    %c0_85 = arith.constant 0 : index
    %c0_86 = arith.constant 0 : index
    %155 = vector.load %arg7[%c3_84, %c0_85, %c0_86] : memref<9x8x32xbf16, #tpu.memory_space<vmem>>, vector<1x8x32xbf16>
    %156 = vector.shape_cast %155 : vector<1x8x32xbf16> to vector<8x32xbf16>
    %cst_87 = arith.constant dense<0.000000e+00> : vector<8x256xf32>
    %157 = tpu.matmul %156, %154, %cst_87 {dimension_numbers = #tpu.dot_dimension_numbers<[1], [0], [0], [1], [0, 0, 1, 1], [], []>} : vector<8x32xbf16>, vector<32x256xbf16>, vector<8x256xf32> -> vector<8x256xf32>
    %158 = arith.addf %149, %157 : vector<8x256xf32>
    %159 = vector.extract_strided_slice %121 {offsets = [0, 128], sizes = [32, 256], strides = [1, 1]} : vector<32x512xf32> to vector<32x256xf32>
    %c4_88 = arith.constant 4 : index
    %c0_89 = arith.constant 0 : index
    %160 = vector.load %arg2[%c4_88, %c0_89] : memref<10x256xf32, #tpu.memory_space<vmem>>, vector<1x256xf32>
    %161 = vector.broadcast %160 : vector<1x256xf32> to vector<32x256xf32>
    %162 = arith.mulf %159, %161 : vector<32x256xf32>
    %163 = arith.truncf %162 : vector<32x256xf32> to vector<32x256xbf16>
    %c4_90 = arith.constant 4 : index
    %c0_91 = arith.constant 0 : index
    %c0_92 = arith.constant 0 : index
    %164 = vector.load %arg7[%c4_90, %c0_91, %c0_92] : memref<9x8x32xbf16, #tpu.memory_space<vmem>>, vector<1x8x32xbf16>
    %165 = vector.shape_cast %164 : vector<1x8x32xbf16> to vector<8x32xbf16>
    %cst_93 = arith.constant dense<0.000000e+00> : vector<8x256xf32>
    %166 = tpu.matmul %165, %163, %cst_93 {dimension_numbers = #tpu.dot_dimension_numbers<[1], [0], [0], [1], [0, 0, 1, 1], [], []>} : vector<8x32xbf16>, vector<32x256xbf16>, vector<8x256xf32> -> vector<8x256xf32>
    %167 = arith.addf %158, %166 : vector<8x256xf32>
    %168 = vector.extract_strided_slice %121 {offsets = [0, 129], sizes = [32, 256], strides = [1, 1]} : vector<32x512xf32> to vector<32x256xf32>
    %c5_94 = arith.constant 5 : index
    %c0_95 = arith.constant 0 : index
    %169 = vector.load %arg2[%c5_94, %c0_95] : memref<10x256xf32, #tpu.memory_space<vmem>>, vector<1x256xf32>
    %170 = vector.broadcast %169 : vector<1x256xf32> to vector<32x256xf32>
    %171 = arith.mulf %168, %170 : vector<32x256xf32>
    %172 = arith.truncf %171 : vector<32x256xf32> to vector<32x256xbf16>
    %c5_96 = arith.constant 5 : index
    %c0_97 = arith.constant 0 : index
    %c0_98 = arith.constant 0 : index
    %173 = vector.load %arg7[%c5_96, %c0_97, %c0_98] : memref<9x8x32xbf16, #tpu.memory_space<vmem>>, vector<1x8x32xbf16>
    %174 = vector.shape_cast %173 : vector<1x8x32xbf16> to vector<8x32xbf16>
    %cst_99 = arith.constant dense<0.000000e+00> : vector<8x256xf32>
    %175 = tpu.matmul %174, %172, %cst_99 {dimension_numbers = #tpu.dot_dimension_numbers<[1], [0], [0], [1], [0, 0, 1, 1], [], []>} : vector<8x32xbf16>, vector<32x256xbf16>, vector<8x256xf32> -> vector<8x256xf32>
    %176 = arith.addf %167, %175 : vector<8x256xf32>
    %177 = vector.extract_strided_slice %121 {offsets = [0, 143], sizes = [32, 256], strides = [1, 1]} : vector<32x512xf32> to vector<32x256xf32>
    %c6_100 = arith.constant 6 : index
    %c0_101 = arith.constant 0 : index
    %178 = vector.load %arg2[%c6_100, %c0_101] : memref<10x256xf32, #tpu.memory_space<vmem>>, vector<1x256xf32>
    %179 = vector.broadcast %178 : vector<1x256xf32> to vector<32x256xf32>
    %180 = arith.mulf %177, %179 : vector<32x256xf32>
    %181 = arith.truncf %180 : vector<32x256xf32> to vector<32x256xbf16>
    %c6_102 = arith.constant 6 : index
    %c0_103 = arith.constant 0 : index
    %c0_104 = arith.constant 0 : index
    %182 = vector.load %arg7[%c6_102, %c0_103, %c0_104] : memref<9x8x32xbf16, #tpu.memory_space<vmem>>, vector<1x8x32xbf16>
    %183 = vector.shape_cast %182 : vector<1x8x32xbf16> to vector<8x32xbf16>
    %cst_105 = arith.constant dense<0.000000e+00> : vector<8x256xf32>
    %184 = tpu.matmul %183, %181, %cst_105 {dimension_numbers = #tpu.dot_dimension_numbers<[1], [0], [0], [1], [0, 0, 1, 1], [], []>} : vector<8x32xbf16>, vector<32x256xbf16>, vector<8x256xf32> -> vector<8x256xf32>
    %185 = arith.addf %176, %184 : vector<8x256xf32>
    %186 = vector.extract_strided_slice %121 {offsets = [0, 144], sizes = [32, 256], strides = [1, 1]} : vector<32x512xf32> to vector<32x256xf32>
    %c7_106 = arith.constant 7 : index
    %c0_107 = arith.constant 0 : index
    %187 = vector.load %arg2[%c7_106, %c0_107] : memref<10x256xf32, #tpu.memory_space<vmem>>, vector<1x256xf32>
    %188 = vector.broadcast %187 : vector<1x256xf32> to vector<32x256xf32>
    %189 = arith.mulf %186, %188 : vector<32x256xf32>
    %190 = arith.truncf %189 : vector<32x256xf32> to vector<32x256xbf16>
    %c7_108 = arith.constant 7 : index
    %c0_109 = arith.constant 0 : index
    %c0_110 = arith.constant 0 : index
    %191 = vector.load %arg7[%c7_108, %c0_109, %c0_110] : memref<9x8x32xbf16, #tpu.memory_space<vmem>>, vector<1x8x32xbf16>
    %192 = vector.shape_cast %191 : vector<1x8x32xbf16> to vector<8x32xbf16>
    %cst_111 = arith.constant dense<0.000000e+00> : vector<8x256xf32>
    %193 = tpu.matmul %192, %190, %cst_111 {dimension_numbers = #tpu.dot_dimension_numbers<[1], [0], [0], [1], [0, 0, 1, 1], [], []>} : vector<8x32xbf16>, vector<32x256xbf16>, vector<8x256xf32> -> vector<8x256xf32>
    %194 = arith.addf %185, %193 : vector<8x256xf32>
    %195 = vector.extract_strided_slice %121 {offsets = [0, 145], sizes = [32, 256], strides = [1, 1]} : vector<32x512xf32> to vector<32x256xf32>
    %c8_112 = arith.constant 8 : index
    %c0_113 = arith.constant 0 : index
    %196 = vector.load %arg2[%c8_112, %c0_113] : memref<10x256xf32, #tpu.memory_space<vmem>>, vector<1x256xf32>
    %197 = vector.broadcast %196 : vector<1x256xf32> to vector<32x256xf32>
    %198 = arith.mulf %195, %197 : vector<32x256xf32>
    %199 = arith.truncf %198 : vector<32x256xf32> to vector<32x256xbf16>
    %c8_114 = arith.constant 8 : index
    %c0_115 = arith.constant 0 : index
    %c0_116 = arith.constant 0 : index
    %200 = vector.load %arg7[%c8_114, %c0_115, %c0_116] : memref<9x8x32xbf16, #tpu.memory_space<vmem>>, vector<1x8x32xbf16>
    %201 = vector.shape_cast %200 : vector<1x8x32xbf16> to vector<8x32xbf16>
    %cst_117 = arith.constant dense<0.000000e+00> : vector<8x256xf32>
    %202 = tpu.matmul %201, %199, %cst_117 {dimension_numbers = #tpu.dot_dimension_numbers<[1], [0], [0], [1], [0, 0, 1, 1], [], []>} : vector<8x32xbf16>, vector<32x256xbf16>, vector<8x256xf32> -> vector<8x256xf32>
    %203 = arith.addf %194, %202 : vector<8x256xf32>
    %c0_118 = arith.constant 0 : index
    %c0_119 = arith.constant 0 : index
    %204 = vector.load %arg8[%c0_118, %c0_119] : memref<8x1xf32, #tpu.memory_space<vmem>>, vector<8x1xf32>
    %205 = vector.broadcast %204 : vector<8x1xf32> to vector<8x256xf32>
    %206 = arith.mulf %203, %205 : vector<8x256xf32>
    %c0_120 = arith.constant 0 : index
    %c0_121 = arith.constant 0 : index
    %207 = vector.load %arg9[%c0_120, %c0_121] : memref<8x1xf32, #tpu.memory_space<vmem>>, vector<8x1xf32>
    %208 = vector.broadcast %207 : vector<8x1xf32> to vector<8x256xf32>
    %209 = arith.addf %206, %208 : vector<8x256xf32>
    %cst_122 = arith.constant 0.000000e+00 : f32
    %210 = vector.broadcast %cst_122 : f32 to vector<8x256xf32>
    %211 = arith.cmpf oge, %209, %210 : vector<8x256xf32>
    %212 = vector.broadcast %3 : f32 to vector<8x256xf32>
    %213 = arith.mulf %212, %209 : vector<8x256xf32>
    %214 = arith.select %211, %209, %213 : vector<8x256xi1>, vector<8x256xf32>
    %215 = vector.broadcast %0 : vector<1x256xf32> to vector<8x256xf32>
    %216 = arith.mulf %214, %215 : vector<8x256xf32>
    %c0_123 = arith.constant 0 : index
    %c0_124 = arith.constant 0 : index
    %c0_125 = arith.constant 0 : index
    %217 = vector.load %arg10[%c0_123, %c0_124, %c0_125] : memref<1x8x256xf32, #tpu.memory_space<vmem>>, vector<1x8x256xf32>
    %218 = vector.shape_cast %217 : vector<1x8x256xf32> to vector<8x256xf32>
    %219 = vector.shape_cast %216 : vector<8x256xf32> to vector<1x8x256xf32>
    tpu.vector_store %arg10[%c0_123, %c0_124, %c0_125], %219 {strides = array<i32>} : memref<1x8x256xf32, #tpu.memory_space<vmem>>, vector<1x8x256xf32>,
    return
  }
  func.func @transform_0(%arg0: i32) -> i32 {
    %c0_i32 = arith.constant 0 : i32
    %c0_i32_0 = arith.constant 0 : i32
    return %c0_i32 : i32
  }
  func.func @transform_1(%arg0: i32) -> (i32, i32) {
    %c0_i32 = arith.constant 0 : i32
    %c0_i32_0 = arith.constant 0 : i32
    %c0_i32_1 = arith.constant 0 : i32
    return %c0_i32, %c0_i32_0 : i32, i32
  }
  func.func @transform_2(%arg0: i32) -> (i32, i32, i32) {
    %c0_i32 = arith.constant 0 : i32
    %c0_i32_0 = arith.constant 0 : i32
    %c0_i32_1 = arith.constant 0 : i32
    return %arg0, %c0_i32, %c0_i32_0 : i32, i32, i32
  }
  func.func @transform_3(%arg0: i32) -> (i32, i32, i32) {
    %c0_i32 = arith.constant 0 : i32
    %c0_i32_0 = arith.constant 0 : i32
    %c0_i32_1 = arith.constant 0 : i32
    %c0_i32_2 = arith.constant 0 : i32
    return %c0_i32, %c0_i32_0, %c0_i32_1 : i32, i32, i32
  }
  func.func @transform_4(%arg0: i32) -> (i32, i32) {
    %c0_i32 = arith.constant 0 : i32
    %c0_i32_0 = arith.constant 0 : i32
    %c0_i32_1 = arith.constant 0 : i32
    return %c0_i32, %c0_i32_0 : i32, i32
  }
  func.func @transform_5(%arg0: i32) -> (i32, i32) {
    %c0_i32 = arith.constant 0 : i32
    %c0_i32_0 = arith.constant 0 : i32
    %c0_i32_1 = arith.constant 0 : i32
    return %c0_i32, %c0_i32_0 : i32, i32
  }
  func.func @transform_6(%arg0: i32) -> (i32, i32, i32) {
    %c0_i32 = arith.constant 0 : i32
    %c0_i32_0 = arith.constant 0 : i32
    %c0_i32_1 = arith.constant 0 : i32
    %c0_i32_2 = arith.constant 0 : i32
    return %c0_i32, %c0_i32_0, %c0_i32_1 : i32, i32, i32
  }
  func.func @transform_7(%arg0: i32) -> (i32, i32) {
    %c0_i32 = arith.constant 0 : i32
    %c0_i32_0 = arith.constant 0 : i32
    %c0_i32_1 = arith.constant 0 : i32
    return %c0_i32, %c0_i32_0 : i32, i32
  }
  func.func @transform_8(%arg0: i32) -> (i32, i32) {
    %c0_i32 = arith.constant 0 : i32
    %c0_i32_0 = arith.constant 0 : i32
    %c0_i32_1 = arith.constant 0 : i32
    return %c0_i32, %c0_i32_0 : i32, i32
  }
  func.func @transform_9(%arg0: i32) -> (i32, i32, i32) {
    %c0_i32 = arith.constant 0 : i32
    %c0_i32_0 = arith.constant 0 : i32
    %c0_i32_1 = arith.constant 0 : i32
    return %arg0, %c0_i32, %c0_i32_0 : i32, i32, i32
  }
}

</mosaic_0001>

<llo_original>
// kernel: conv_cam_layer.1
$region0: #{conv_cam_layer.1}
  #allocation0 [shape = 'u32[]', space=smem, size = 0x4, offset = 0x4, fixed_abs, tag = 'smem constant byte address 0x4 - core index']
  #allocation1 [shape = 'u32[144,128]{1,0:T(1,128)}', space=vmem, size = 0x12000, scoped, tag = 'internal scratch']
  %s0 = inlined_call_operand.vmem [shape: f32[3], index: 0, kind: input, shape index: {}]
  %s1 = inlined_call_operand.vmem [shape: f32[10,256], index: 1, kind: input, shape index: {}]
  %s2 = inlined_call_operand.vmem [shape: f32[2,8,256], index: 2, kind: input, shape index: {}]
  %s3 = inlined_call_operand.vmem [shape: bf16[9,32,8], index: 3, kind: input, shape index: {}]
  %s4 = inlined_call_operand.vmem [shape: f32[32,1], index: 4, kind: input, shape index: {}]
  %s5 = inlined_call_operand.vmem [shape: f32[32,1], index: 5, kind: input, shape index: {}]
  %s6 = inlined_call_operand.vmem [shape: bf16[9,8,32], index: 6, kind: input, shape index: {}]
  %s7 = inlined_call_operand.vmem [shape: f32[8,1], index: 7, kind: input, shape index: {}]
  %s8 = inlined_call_operand.vmem [shape: f32[8,1], index: 8, kind: input, shape index: {}]
  %s9 = inlined_call_operand.vmem [shape: f32[2,8,256], index: 9, kind: output, shape index: {}]
  %s10 = sld [smem:[#allocation0]]
  $region73: #{conv_cam_layer.1} parent=0
    _
  %s12 = ssub.s32 1, %s10
  %s13 = scalar_select 0, %s12, %s10
  $region1: #{conv_cam_layer.1} parent=0
    #allocation2 [shape = 'u8[512]{0}', space=smem, size = 0x200, scoped, tag = 'input window, operand 0, single buffered']
    #allocation3 [shape = 's32[2]{0}', space=sflag, size = 0x8, scoped, tag = 'scoped memory for conv_cam_layer.1']
    %14 = vsyncpa [#allocation3], 0
    loop: start=0, step=1, limit=4
    $region2: #{conv_cam_layer.1} parent=1 // loop_pre_header
      _
    $region3: #{conv_cam_layer.1} parent=1 // loop_header
      %s16 = sphi 0, %s20
      %p17 = scmp.ge.s32.totalorder %s16, 4
      %s24 = sphi 0, %s24
      %s26 = sphi 0, %s24
      %s27 = sphi 0, %s26
      %s41 = sphi 0, %s27
      %s45 = sphi 0, %s45
      %s47 = sphi 0, %s45
      %s48 = sphi 0, %s47
      %s62 = sphi 0, %s48
      %s68 = sphi 0, %s70
      %s71 = sphi 0, %s68
      %s72 = sphi 0, %s71
      %s88 = sphi 0, %s72
      %s92 = sphi 0, %s92
      %s94 = sphi 0, %s92
      %s95 = sphi 0, %s94
      %s109 = sphi 0, %s95
      %s113 = sphi 0, %s113
      %s115 = sphi 0, %s113
      %s116 = sphi 0, %s115
      %s130 = sphi 0, %s116
      %s134 = sphi 0, %s134
      %s136 = sphi 0, %s134
      %s137 = sphi 0, %s136
      %s151 = sphi 0, %s137
      %s155 = sphi 0, %s155
      %s157 = sphi 0, %s155
      %s158 = sphi 0, %s157
      %s172 = sphi 0, %s158
      %s176 = sphi 0, %s176
      %s178 = sphi 0, %s176
      %s179 = sphi 0, %s178
      %s193 = sphi 0, %s179
      %s197 = sphi 0, %s197
      %s199 = sphi 0, %s197
      %s200 = sphi 0, %s199
      %s214 = sphi 0, %s200
      %s220 = sphi 0, %s222
      %s223 = sphi 0, %s220
      %s224 = sphi 0, %s223
      %s240 = sphi 0, %s224
    $region4: #{conv_cam_layer.1} parent=1 // loop_header_branch
      %19 = sbr.rel (%p17) target = $region8
    $region5: #{conv_cam_layer.1} parent=1 // loop_body
      %s21 = ssub.s32 %s16, 1
      %s22 = ssub.s32 %s16, 2
      %s23 = sadd.s32 %s16, 1
      %s25 = sadd.s32 %s24, 1
      %p28 = scmp.eq.s32.totalorder %s16, 1
      %p29 = scmp.ne.s32.totalorder %s24, %s26
      %p30 = scmp.eq.s32.totalorder %s16, 0
      %p31 = por %p29, %p30
      %p32 = scmp.ne.s32.totalorder %s24, %s26
      %p33 = scmp.eq.s32.totalorder %s21, 1
      %p34 = por %p32, %p33
      %p35 = scmp.ne.s32.totalorder %s26, %s27
      %p36 = scmp.eq.s32.totalorder %s21, 0
      %p37 = por %p35, %p36
      %p38 = scmp.ne.s32.totalorder %s26, %s27
      %p39 = scmp.eq.s32.totalorder %s22, 1
      %p40 = por %p38, %p39
      %p42 = scmp.ne.s32.totalorder %s27, %s41
      %p43 = scmp.eq.s32.totalorder %s22, 0
      %p44 = por %p42, %p43
      %s46 = sadd.s32 %s45, 1
      %p49 = scmp.eq.s32.totalorder %s16, 1
      %p50 = scmp.ne.s32.totalorder %s45, %s47
      %p51 = scmp.eq.s32.totalorder %s16, 0
      %p52 = por %p50, %p51
      %p53 = scmp.ne.s32.totalorder %s45, %s47
      %p54 = scmp.eq.s32.totalorder %s21, 1
      %p55 = por %p53, %p54
      %p56 = scmp.ne.s32.totalorder %s47, %s48
      %p57 = scmp.eq.s32.totalorder %s21, 0
      %p58 = por %p56, %p57
      %p59 = scmp.ne.s32.totalorder %s47, %s48
      %p60 = scmp.eq.s32.totalorder %s22, 1
      %p61 = por %p59, %p60
      %p63 = scmp.ne.s32.totalorder %s48, %s62
      %p64 = scmp.eq.s32.totalorder %s22, 0
      %p65 = por %p63, %p64
      %s66 = ssub.s32 %s16, %s23
      %p67 = scmp.eq.s32.totalorder %s66, 0
      %s69 = sadd.s32 %s68, 1
      %s70 = scalar_select %p67, %s68, %s69
      %p73 = pneg %p67
      %p74 = scmp.eq.s32.totalorder %s16, 1
      %p75 = por %p73, %p74
      %p76 = scmp.ne.s32.totalorder %s68, %s71
      %p77 = scmp.eq.s32.totalorder %s16, 0
      %p78 = por %p76, %p77
      %p79 = scmp.ne.s32.totalorder %s68, %s71
      %p80 = scmp.eq.s32.totalorder %s21, 1
      %p81 = por %p79, %p80
      %p82 = scmp.ne.s32.totalorder %s71, %s72
      %p83 = scmp.eq.s32.totalorder %s21, 0
      %p84 = por %p82, %p83
      %p85 = scmp.ne.s32.totalorder %s71, %s72
      %p86 = scmp.eq.s32.totalorder %s22, 1
      %p87 = por %p85, %p86
      %p89 = scmp.ne.s32.totalorder %s72, %s88
      %p90 = scmp.eq.s32.totalorder %s22, 0
      %p91 = por %p89, %p90
      %s93 = sadd.s32 %s92, 1
      %p96 = scmp.eq.s32.totalorder %s16, 1
      %p97 = scmp.ne.s32.totalorder %s92, %s94
      %p98 = scmp.eq.s32.totalorder %s16, 0
      %p99 = por %p97, %p98
      %p100 = scmp.ne.s32.totalorder %s92, %s94
      %p101 = scmp.eq.s32.totalorder %s21, 1
      %p102 = por %p100, %p101
      %p103 = scmp.ne.s32.totalorder %s94, %s95
      %p104 = scmp.eq.s32.totalorder %s21, 0
      %p105 = por %p103, %p104
      %p106 = scmp.ne.s32.totalorder %s94, %s95
      %p107 = scmp.eq.s32.totalorder %s22, 1
      %p108 = por %p106, %p107
      %p110 = scmp.ne.s32.totalorder %s95, %s109
      %p111 = scmp.eq.s32.totalorder %s22, 0
      %p112 = por %p110, %p111
      %s114 = sadd.s32 %s113, 1
      %p117 = scmp.eq.s32.totalorder %s16, 1
      %p118 = scmp.ne.s32.totalorder %s113, %s115
      %p119 = scmp.eq.s32.totalorder %s16, 0
      %p120 = por %p118, %p119
      %p121 = scmp.ne.s32.totalorder %s113, %s115
      %p122 = scmp.eq.s32.totalorder %s21, 1
      %p123 = por %p121, %p122
      %p124 = scmp.ne.s32.totalorder %s115, %s116
      %p125 = scmp.eq.s32.totalorder %s21, 0
      %p126 = por %p124, %p125
      %p127 = scmp.ne.s32.totalorder %s115, %s116
      %p128 = scmp.eq.s32.totalorder %s22, 1
      %p129 = por %p127, %p128
      %p131 = scmp.ne.s32.totalorder %s116, %s130
      %p132 = scmp.eq.s32.totalorder %s22, 0
      %p133 = por %p131, %p132
      %s135 = sadd.s32 %s134, 1
      %p138 = scmp.eq.s32.totalorder %s16, 1
      %p139 = scmp.ne.s32.totalorder %s134, %s136
      %p140 = scmp.eq.s32.totalorder %s16, 0
      %p141 = por %p139, %p140
      %p142 = scmp.ne.s32.totalorder %s134, %s136
      %p143 = scmp.eq.s32.totalorder %s21, 1
      %p144 = por %p142, %p143
      %p145 = scmp.ne.s32.totalorder %s136, %s137
      %p146 = scmp.eq.s32.totalorder %s21, 0
      %p147 = por %p145, %p146
      %p148 = scmp.ne.s32.totalorder %s136, %s137
      %p149 = scmp.eq.s32.totalorder %s22, 1
      %p150 = por %p148, %p149
      %p152 = scmp.ne.s32.totalorder %s137, %s151
      %p153 = scmp.eq.s32.totalorder %s22, 0
      %p154 = por %p152, %p153
      %s156 = sadd.s32 %s155, 1
      %p159 = scmp.eq.s32.totalorder %s16, 1
      %p160 = scmp.ne.s32.totalorder %s155, %s157
      %p161 = scmp.eq.s32.totalorder %s16, 0
      %p162 = por %p160, %p161
      %p163 = scmp.ne.s32.totalorder %s155, %s157
      %p164 = scmp.eq.s32.totalorder %s21, 1
      %p165 = por %p163, %p164
      %p166 = scmp.ne.s32.totalorder %s157, %s158
      %p167 = scmp.eq.s32.totalorder %s21, 0
      %p168 = por %p166, %p167
      %p169 = scmp.ne.s32.totalorder %s157, %s158
      %p170 = scmp.eq.s32.totalorder %s22, 1
      %p171 = por %p169, %p170
      %p173 = scmp.ne.s32.totalorder %s158, %s172
      %p174 = scmp.eq.s32.totalorder %s22, 0
      %p175 = por %p173, %p174
      %s177 = sadd.s32 %s176, 1
      %p180 = scmp.eq.s32.totalorder %s16, 1
      %p181 = scmp.ne.s32.totalorder %s176, %s178
      %p182 = scmp.eq.s32.totalorder %s16, 0
      %p183 = por %p181, %p182
      %p184 = scmp.ne.s32.totalorder %s176, %s178
      %p185 = scmp.eq.s32.totalorder %s21, 1
      %p186 = por %p184, %p185
      %p187 = scmp.ne.s32.totalorder %s178, %s179
      %p188 = scmp.eq.s32.totalorder %s21, 0
      %p189 = por %p187, %p188
      %p190 = scmp.ne.s32.totalorder %s178, %s179
      %p191 = scmp.eq.s32.totalorder %s22, 1
      %p192 = por %p190, %p191
      %p194 = scmp.ne.s32.totalorder %s179, %s193
      %p195 = scmp.eq.s32.totalorder %s22, 0
      %p196 = por %p194, %p195
      %s198 = sadd.s32 %s197, 1
      %p201 = scmp.eq.s32.totalorder %s16, 1
      %p202 = scmp.ne.s32.totalorder %s197, %s199
      %p203 = scmp.eq.s32.totalorder %s16, 0
      %p204 = por %p202, %p203
      %p205 = scmp.ne.s32.totalorder %s197, %s199
      %p206 = scmp.eq.s32.totalorder %s21, 1
      %p207 = por %p205, %p206
      %p208 = scmp.ne.s32.totalorder %s199, %s200
      %p209 = scmp.eq.s32.totalorder %s21, 0
      %p210 = por %p208, %p209
      %p211 = scmp.ne.s32.totalorder %s199, %s200
      %p212 = scmp.eq.s32.totalorder %s22, 1
      %p213 = por %p211, %p212
      %p215 = scmp.ne.s32.totalorder %s200, %s214
      %p216 = scmp.eq.s32.totalorder %s22, 0
      %p217 = por %p215, %p216
      %s218 = ssub.s32 %s16, %s23
      %p219 = scmp.eq.s32.totalorder %s218, 0
      %s221 = sadd.s32 %s220, 1
      %s222 = scalar_select %p219, %s220, %s221
      %p225 = pneg %p219
      %p226 = scmp.eq.s32.totalorder %s16, 1
      %p227 = por %p225, %p226
      %p228 = scmp.ne.s32.totalorder %s220, %s223
      %p229 = scmp.eq.s32.totalorder %s16, 0
      %p230 = por %p228, %p229
      %p231 = scmp.ne.s32.totalorder %s220, %s223
      %p232 = scmp.eq.s32.totalorder %s21, 1
      %p233 = por %p231, %p232
      %p234 = scmp.ne.s32.totalorder %s223, %s224
      %p235 = scmp.eq.s32.totalorder %s21, 0
      %p236 = por %p234, %p235
      %p237 = scmp.ne.s32.totalorder %s223, %s224
      %p238 = scmp.eq.s32.totalorder %s22, 1
      %p239 = por %p237, %p238
      %p241 = scmp.ne.s32.totalorder %s224, %s240
      %p242 = scmp.eq.s32.totalorder %s22, 0
      %p243 = por %p241, %p242
      %p244 = scmp.le.s32.totalorder 1, %s16
      %p245 = scmp.lt.s32.totalorder %s16, 3
      %p246 = pnand %p244, %p245
      %p247 = pneg %p246
      // Predicated region
      $region9: #{conv_cam_layer.1} parent=5 // pred_check
        _
      $region10: #{conv_cam_layer.1} parent=5 // pred_check_branch
        %249 = sbr.rel (%p246) target = $region12
      $region11: #{conv_cam_layer.1} parent=5 // pred_region
        %s250 = ssub.s32 %s16, 1
        // Predicated region
        $region13: #{conv_cam_layer.1} parent=11 // pred_check
          %p251 = pneg %p37
        $region14: #{conv_cam_layer.1} parent=11 // pred_check_branch
          %253 = sbr.rel (%p251) target = $region16
        $region15: #{conv_cam_layer.1} parent=11 // pred_region
          %s255 = ssub.s32 16, 16
          %256 = vsyncadd [#allocation3], %s255
          %s258 = sshll.u32 %s0, 4
          %s259 = int_to_ptr.vmem [resolvable:$true] %s258
          %261 = dma.vmem_to_smem %s259, 16, [#allocation2], [#allocation3]
        $region16: #{conv_cam_layer.1} parent=11 // pred_fallthru
          _
        // Predicated region
        $region17: #{conv_cam_layer.1} parent=11 // pred_check
          %p262 = pneg %p58
        $region18: #{conv_cam_layer.1} parent=11 // pred_check_branch
          %264 = sbr.rel (%p262) target = $region20
        $region19: #{conv_cam_layer.1} parent=11 // pred_region
          _
        $region20: #{conv_cam_layer.1} parent=11 // pred_fallthru
          _
        // Predicated region
        $region21: #{conv_cam_layer.1} parent=11 // pred_check
          %p265 = pneg %p105
        $region22: #{conv_cam_layer.1} parent=11 // pred_check_branch
          %267 = sbr.rel (%p265) target = $region24
        $region23: #{conv_cam_layer.1} parent=11 // pred_region
          _
        $region24: #{conv_cam_layer.1} parent=11 // pred_fallthru
          _
        // Predicated region
        $region25: #{conv_cam_layer.1} parent=11 // pred_check
          %p268 = pneg %p126
        $region26: #{conv_cam_layer.1} parent=11 // pred_check_branch
          %270 = sbr.rel (%p268) target = $region28
        $region27: #{conv_cam_layer.1} parent=11 // pred_region
          _
        $region28: #{conv_cam_layer.1} parent=11 // pred_fallthru
          _
        // Predicated region
        $region29: #{conv_cam_layer.1} parent=11 // pred_check
          %p271 = pneg %p147
        $region30: #{conv_cam_layer.1} parent=11 // pred_check_branch
          %273 = sbr.rel (%p271) target = $region32
        $region31: #{conv_cam_layer.1} parent=11 // pred_region
          _
        $region32: #{conv_cam_layer.1} parent=11 // pred_fallthru
          _
        // Predicated region
        $region33: #{conv_cam_layer.1} parent=11 // pred_check
          %p274 = pneg %p168
        $region34: #{conv_cam_layer.1} parent=11 // pred_check_branch
          %276 = sbr.rel (%p274) target = $region36
        $region35: #{conv_cam_layer.1} parent=11 // pred_region
          _
        $region36: #{conv_cam_layer.1} parent=11 // pred_fallthru
          _
        // Predicated region
        $region37: #{conv_cam_layer.1} parent=11 // pred_check
          %p277 = pneg %p189
        $region38: #{conv_cam_layer.1} parent=11 // pred_check_branch
          %279 = sbr.rel (%p277) target = $region40
        $region39: #{conv_cam_layer.1} parent=11 // pred_region
          _
        $region40: #{conv_cam_layer.1} parent=11 // pred_fallthru
          _
        // Predicated region
        $region41: #{conv_cam_layer.1} parent=11 // pred_check
          %p280 = pneg %p210
        $region42: #{conv_cam_layer.1} parent=11 // pred_check_branch
          %282 = sbr.rel (%p280) target = $region44
        $region43: #{conv_cam_layer.1} parent=11 // pred_region
          _
        $region44: #{conv_cam_layer.1} parent=11 // pred_fallthru
          _
      $region12: #{conv_cam_layer.1} parent=5 // pred_fallthru
        _
      %p283 = scmp.lt.s32.totalorder %s16, 2
      // Predicated region
      $region45: #{conv_cam_layer.1} parent=5 // pred_check
        %p284 = pneg %p283
      $region46: #{conv_cam_layer.1} parent=5 // pred_check_branch
        %286 = sbr.rel (%p284) target = $region48
      $region47: #{conv_cam_layer.1} parent=5 // pred_region
        // Predicated region
        $region49: #{conv_cam_layer.1} parent=47 // pred_check
          %p287 = pneg %p78
        $region50: #{conv_cam_layer.1} parent=47 // pred_check_branch
          %289 = sbr.rel (%p287) target = $region52
        $region51: #{conv_cam_layer.1} parent=47 // pred_region
          %p290 = scmp.lt.s32.totalorder %s16, 1
          %s291 = scalar_select %p290, %s16, 1
          %s292 = smul.addr %s291, 2
          %s293 = smul.addr %s292, 8
          %s294 = scalar_lea.vmem %s2, %s293
        $region52: #{conv_cam_layer.1} parent=47 // pred_fallthru
          _
      $region48: #{conv_cam_layer.1} parent=5 // pred_fallthru
        _
      %p295 = scmp.le.s32.totalorder 1, %s16
      %p296 = scmp.lt.s32.totalorder %s16, 3
      %p297 = pnand %p295, %p296
      %p298 = pneg %p297
      // Predicated region
      $region53: #{conv_cam_layer.1} parent=5 // pred_check
        _
      $region54: #{conv_cam_layer.1} parent=5 // pred_check_branch
        %300 = sbr.rel (%p297) target = $region56
      $region55: #{conv_cam_layer.1} parent=5 // pred_region
        %s301 = ssub.s32 %s16, 1
        // Predicated region
        $region57: #{conv_cam_layer.1} parent=55 // pred_check
          %p302 = pneg %p37
        $region58: #{conv_cam_layer.1} parent=55 // pred_check_branch
          %304 = sbr.rel (%p302) target = $region60
        $region59: #{conv_cam_layer.1} parent=55 // pred_region
          %305 = dma.done [#allocation3], 16
        $region60: #{conv_cam_layer.1} parent=55 // pred_fallthru
          _
        %306 = sfence
        %p307 = pneg %p37
        %p308 = pneg %p34
        %p309 = pneg %p58
        %p310 = pneg %p55
        %p311 = scmp.lt.s32.totalorder %s21, 1
        %s312 = scalar_select %p311, %s21, 1
        %s313 = smul.addr %s312, 2
        %s314 = smul.addr %s313, 8
        %s315 = scalar_lea.vmem %s2, %s314
        %p316 = pneg %p84
        %p317 = pneg %p81
        %p318 = pneg %p105
        %p319 = pneg %p102
        %p320 = pneg %p126
        %p321 = pneg %p123
        %p322 = pneg %p147
        %p323 = pneg %p144
        %p324 = pneg %p168
        %p325 = pneg %p165
        %p326 = pneg %p189
        %p327 = pneg %p186
        %p328 = pneg %p210
        %p329 = pneg %p207
        %p330 = pneg %p236
        %p331 = pneg %p233
        %p332 = scmp.lt.s32.totalorder %s21, 1
        %s333 = scalar_select %p332, %s21, 1
        %s334 = smul.addr %s333, 2
        %s335 = smul.addr %s334, 8
        %s336 = scalar_lea.vmem %s9, %s335
        %p337 = scmp.lt.s32.totalorder %s21, 1
        %s338 = scalar_select %p337, %s21, 1
        %s339 = smul.addr %s338, 2
        %s340 = smul.addr %s339, 8
        %s341 = scalar_lea.vmem %s2, %s340
        %p342 = scmp.lt.s32.totalorder %s21, 1
        %s343 = scalar_select %p342, %s21, 1
        %s344 = smul.addr %s343, 2
        %s345 = smul.addr %s344, 8
        %s346 = scalar_lea.vmem %s9, %s345
        %s348 = scalar_lea.vmem %s1, 17
        %v349 = vld [vmem:[%s348] ss:$8 sm:$0x3]
        %s350 = sld [smem:[#allocation2]]
        %s351 = sld [smem:[#allocation2 + $0x1]]
        %s352 = sld [smem:[#allocation2 + $0x2]]
        %v353 = vld [vmem:[%s341] sm:$0xff]
        %v354 = vld [vmem:[%s341 + $0x8] sm:$0xff]
        %v355 = vld [vmem:[%s1] ss:$8 sm:$0x3]
        %v357 = vlaneseq
        %v358 = vshrl.u32 %v357, 7
        %v359 = vsub.s32 0, %v358
        %v360 = vrot.slane %v355, %v359
        %v361 = vlaneseq
        %v362 = vshrl.u32 %v361, 7
        %v363 = vsub.s32 1, %v362
        %v364 = vrot.slane %v355, %v363
        %365 = vrot.lane.b32.xlu0 %v360, 111
        %v366 = vpop.permute.xlu0 %365
        %367 = vrot.lane.b32.xlu0 %v364, 111
        %v368 = vpop.permute.xlu0 %367
        %vm369 = vcmask 908288
        %v370 = vsel %vm369, %v366, %v368
        %v374 = vmul.f32 %v366, 0.0
        %v375 = vmul.f32 %v353, %v370
        %v376 = vmul.f32 %v354, %v368
        %v377 = vpack.c.bf16 %v374, %v374
        %v378 = vpack.c.bf16 %v375, %v375
        %v379 = vpack.c.bf16 %v376, %v376
        %v380 = vld [vmem:[%s3] sm:$0xf]
        %v381 = vld [vmem:[%s3 + $0x4] sm:$0xf]
        %v382 = vld [vmem:[%s3 + $0x8] sm:$0xf]
        %v383 = vld [vmem:[%s3 + $0xc] sm:$0xf]
        %s384 = scalar_lea.vmem %s1, 1
        %v385 = vld [vmem:[%s384] ss:$8 sm:$0x3]
        %v387 = vlaneseq
        %v388 = vshrl.u32 %v387, 7
        %v389 = vsub.s32 0, %v388
        %v390 = vrot.slane %v385, %v389
        %v391 = vlaneseq
        %v392 = vshrl.u32 %v391, 7
        %v393 = vsub.s32 1, %v392
        %v394 = vrot.slane %v385, %v393
        %395 = vrot.lane.b32.xlu0 %v390, 112
        %v396 = vpop.permute.xlu0 %395
        %397 = vrot.lane.b32.xlu0 %v394, 112
        %v398 = vpop.permute.xlu0 %397
        %vm399 = vcmask 916480
        %v400 = vsel %vm399, %v396, %v398
        %v404 = vmul.f32 %v396, 0.0
        %v405 = vmul.f32 %v353, %v400
        %v406 = vmul.f32 %v354, %v398
        %v407 = vpack.c.bf16 %v404, %v404
        %v408 = vpack.c.bf16 %v405, %v405
        %v409 = vpack.c.bf16 %v406, %v406
        %s410 = scalar_lea.vmem %s3, 16
        %v411 = vld [vmem:[%s410] sm:$0xf]
        %v412 = vld [vmem:[%s410 + $0x4] sm:$0xf]
        %v413 = vld [vmem:[%s410 + $0x8] sm:$0xf]
        %v414 = vld [vmem:[%s410 + $0xc] sm:$0xf]
        %v419 = vunpack.c.l.b16 %v411
        %v420 = vunpack.c.l.b16 %v412
        %v421 = vunpack.c.l.b16 %v413
        %v422 = vunpack.c.l.b16 %v414
        %v423 = vpack.c.b16 %v420, %v419
        %v424 = vpack.c.b16 %v422, %v421
        %428 = vrot.lane.b32.xlu0 %v407, 16
        %v429 = vpop.permute.xlu0 %428
        %430 = vrot.lane.b32.xlu0 %v408, 16
        %v431 = vpop.permute.xlu0 %430
        %432 = vrot.lane.b32.xlu0 %v409, 16
        %v433 = vpop.permute.xlu0 %432
        %vm434 = vcmask 130048
        %v435 = vsel %vm434, %v429, %v431
        %v436 = vsel %vm434, %v431, %v433
        %vm437 = vcmask 64512
        %v439 = vsel %vm437, %v423, 0
        %v442 = vsel %vm437, %v424, 0
        %vm444 = vcmask 1043456
        %v446 = vsel %vm444, %v435, 0
        %v449 = vsel %vm444, %v436, 0
        %451 = vmatprep.subr.bf16.mxu0 0
        %452 = vmatpush1.bf16.msra.mxu0 0
        %453 = vmatprep.subr.bf16.mxu0 0
        %454 = vmatpush1.bf16.msra.mxu0 0
        %455 = vmatprep.subr.bf16.mxu0 0
        %456 = vmatpush1.bf16.msra.mxu0 0
        %457 = vmatprep.subr.bf16.mxu0 0
        %458 = vmatpush1.bf16.msra.mxu0 0
        %459 = vmatprep.subr.bf16.mxu0 0
        %460 = vmatpush1.bf16.msra.mxu0 0
        %461 = vmatprep.subr.bf16.mxu0 0
        %462 = vmatpush1.bf16.msra.mxu0 0
        %463 = vmatprep.subr.bf16.mxu0 0
        %464 = vmatpush1.bf16.msra.mxu0 0
        %465 = vmatprep.subr.bf16.mxu0 %v449
        %466 = vmatpush1.bf16.msra.mxu0 %v446
        %467 = vmatprep.subr.bf16.mxu0 0
        %468 = vmatpush2.bf16.msra.mxu0 0
        %469 = vmatprep.subr.bf16.mxu0 0
        %470 = vmatpush2.bf16.msra.mxu0 0
        %471 = vmatprep.subr.bf16.mxu0 0
        %472 = vmatpush2.bf16.msra.mxu0 0
        %473 = vmatprep.subr.bf16.mxu0 0
        %474 = vmatpush2.bf16.msra.mxu0 0
        %475 = vmatprep.subr.bf16.mxu0 0
        %476 = vmatpush2.bf16.msra.mxu0 0
        %477 = vmatprep.subr.bf16.mxu0 0
        %478 = vmatpush2.bf16.msra.mxu0 0
        %479 = vmatprep.subr.bf16.mxu0 0
        %480 = vmatpush2.bf16.msra.mxu0 0
        %481 = vmatprep.subr.bf16.mxu0 0
        %482 = vmatpush2.bf16.msra.mxu0 0
        %483 = vmatprep.mubr.bf16.mxu0 0
        %484 = vmatmul.mubr.bf16.gmra.mxu0 %v439
        %v485 = vpop.f32.mrf.mxu0
        %v486 = vadd.f32 0.0, %v485
        %v487 = vpop.f32.mrf.mxu0
        %v488 = vadd.f32 0.0, %v487
        %v489 = vpop.f32.mrf.mxu0
        %v490 = vadd.f32 0.0, %v489
        %v491 = vpop.f32.mrf.mxu0
        %v492 = vadd.f32 0.0, %v491
        %493 = vmatprep.mubr.bf16.mxu0 0
        %494 = vmatmul.mubr.bf16.gmra.mxu0 %v442
        %v495 = vpop.f32.mrf.mxu0
        %v496 = vadd.f32 0.0, %v495
        %v497 = vpop.f32.mrf.mxu0
        %v498 = vadd.f32 0.0, %v497
        %v499 = vpop.f32.mrf.mxu0
        %v500 = vadd.f32 0.0, %v499
        %v501 = vpop.f32.mrf.mxu0
        %v502 = vadd.f32 0.0, %v501
        %503 = vdwg.mxu0
        %v508 = vunpack.c.l.b16 %v380
        %v509 = vunpack.c.l.b16 %v381
        %v510 = vunpack.c.l.b16 %v382
        %v511 = vunpack.c.l.b16 %v383
        %v512 = vpack.c.b16 %v509, %v508
        %v513 = vpack.c.b16 %v511, %v510
        %517 = vrot.lane.b32.xlu0 %v377, 17
        %v518 = vpop.permute.xlu0 %517
        %519 = vrot.lane.b32.xlu0 %v378, 17
        %v520 = vpop.permute.xlu0 %519
        %521 = vrot.lane.b32.xlu0 %v379, 17
        %v522 = vpop.permute.xlu0 %521
        %vm523 = vcmask 138240
        %v524 = vsel %vm523, %v518, %v520
        %v525 = vsel %vm523, %v520, %v522
        %v527 = vsel %vm437, %v512, 0
        %v530 = vsel %vm437, %v513, 0
        %v533 = vsel %vm444, %v524, 0
        %v536 = vsel %vm444, %v525, 0
        %538 = vmatprep.subr.bf16.mxu0 0
        %539 = vmatpush1.bf16.msra.mxu0 0
        %540 = vmatprep.subr.bf16.mxu0 0
        %541 = vmatpush1.bf16.msra.mxu0 0
        %542 = vmatprep.subr.bf16.mxu0 0
        %543 = vmatpush1.bf16.msra.mxu0 0
        %544 = vmatprep.subr.bf16.mxu0 0
        %545 = vmatpush1.bf16.msra.mxu0 0
        %546 = vmatprep.subr.bf16.mxu0 0
        %547 = vmatpush1.bf16.msra.mxu0 0
        %548 = vmatprep.subr.bf16.mxu0 0
        %549 = vmatpush1.bf16.msra.mxu0 0
        %550 = vmatprep.subr.bf16.mxu0 0
        %551 = vmatpush1.bf16.msra.mxu0 0
        %552 = vmatprep.subr.bf16.mxu0 %v536
        %553 = vmatpush1.bf16.msra.mxu0 %v533
        %554 = vmatprep.subr.bf16.mxu0 0
        %555 = vmatpush2.bf16.msra.mxu0 0
        %556 = vmatprep.subr.bf16.mxu0 0
        %557 = vmatpush2.bf16.msra.mxu0 0
        %558 = vmatprep.subr.bf16.mxu0 0
        %559 = vmatpush2.bf16.msra.mxu0 0
        %560 = vmatprep.subr.bf16.mxu0 0
        %561 = vmatpush2.bf16.msra.mxu0 0
        %562 = vmatprep.subr.bf16.mxu0 0
        %563 = vmatpush2.bf16.msra.mxu0 0
        %564 = vmatprep.subr.bf16.mxu0 0
        %565 = vmatpush2.bf16.msra.mxu0 0
        %566 = vmatprep.subr.bf16.mxu0 0
        %567 = vmatpush2.bf16.msra.mxu0 0
        %568 = vmatprep.subr.bf16.mxu0 0
        %569 = vmatpush2.bf16.msra.mxu0 0
        %570 = vmatprep.mubr.bf16.mxu0 0
        %571 = vmatmul.mubr.bf16.gmra.mxu0 %v527
        %v572 = vpop.f32.mrf.mxu0
        %v573 = vadd.f32 %v486, %v572
        %v574 = vpop.f32.mrf.mxu0
        %v575 = vadd.f32 %v488, %v574
        %v576 = vpop.f32.mrf.mxu0
        %v577 = vadd.f32 %v490, %v576
        %v578 = vpop.f32.mrf.mxu0
        %v579 = vadd.f32 %v492, %v578
        %580 = vmatprep.mubr.bf16.mxu0 0
        %581 = vmatmul.mubr.bf16.gmra.mxu0 %v530
        %v582 = vpop.f32.mrf.mxu0
        %v583 = vadd.f32 %v496, %v582
        %v584 = vpop.f32.mrf.mxu0
        %v585 = vadd.f32 %v498, %v584
        %v586 = vpop.f32.mrf.mxu0
        %v587 = vadd.f32 %v500, %v586
        %v588 = vpop.f32.mrf.mxu0
        %v589 = vadd.f32 %v502, %v588
        %590 = vdwg.mxu0
        %s591 = scalar_lea.vmem %s1, 2
        %v592 = vld [vmem:[%s591] ss:$8 sm:$0x3]
        %v594 = vlaneseq
        %v595 = vshrl.u32 %v594, 7
        %v596 = vsub.s32 0, %v595
        %v597 = vrot.slane %v592, %v596
        %v598 = vlaneseq
        %v599 = vshrl.u32 %v598, 7
        %v600 = vsub.s32 1, %v599
        %v601 = vrot.slane %v592, %v600
        %602 = vrot.lane.b32.xlu0 %v597, 113
        %v603 = vpop.permute.xlu0 %602
        %604 = vrot.lane.b32.xlu0 %v601, 113
        %v605 = vpop.permute.xlu0 %604
        %vm606 = vcmask 924672
        %v607 = vsel %vm606, %v603, %v605
        %v611 = vmul.f32 %v603, 0.0
        %v612 = vmul.f32 %v353, %v607
        %v613 = vmul.f32 %v354, %v605
        %v614 = vpack.c.bf16 %v611, %v611
        %v615 = vpack.c.bf16 %v612, %v612
        %v616 = vpack.c.bf16 %v613, %v613
        %s617 = scalar_lea.vmem %s3, 32
        %v618 = vld [vmem:[%s617] sm:$0xf]
        %v619 = vld [vmem:[%s617 + $0x4] sm:$0xf]
        %v620 = vld [vmem:[%s617 + $0x8] sm:$0xf]
        %v621 = vld [vmem:[%s617 + $0xc] sm:$0xf]
        %v626 = vunpack.c.l.b16 %v618
        %v627 = vunpack.c.l.b16 %v619
        %v628 = vunpack.c.l.b16 %v620
        %v629 = vunpack.c.l.b16 %v621
        %v630 = vpack.c.b16 %v627, %v626
        %v631 = vpack.c.b16 %v629, %v628
        %635 = vrot.lane.b32.xlu0 %v614, 15
        %v636 = vpop.permute.xlu0 %635
        %637 = vrot.lane.b32.xlu0 %v615, 15
        %v638 = vpop.permute.xlu0 %637
        %639 = vrot.lane.b32.xlu0 %v616, 15
        %v640 = vpop.permute.xlu0 %639
        %vm641 = vcmask 121856
        %v642 = vsel %vm641, %v636, %v638
        %v643 = vsel %vm641, %v638, %v640
        %v645 = vsel %vm437, %v630, 0
        %v648 = vsel %vm437, %v631, 0
        %v651 = vsel %vm444, %v642, 0
        %v654 = vsel %vm444, %v643, 0
        %656 = vmatprep.subr.bf16.mxu0 0
        %657 = vmatpush1.bf16.msra.mxu0 0
        %658 = vmatprep.subr.bf16.mxu0 0
        %659 = vmatpush1.bf16.msra.mxu0 0
        %660 = vmatprep.subr.bf16.mxu0 0
        %661 = vmatpush1.bf16.msra.mxu0 0
        %662 = vmatprep.subr.bf16.mxu0 0
        %663 = vmatpush1.bf16.msra.mxu0 0
        %664 = vmatprep.subr.bf16.mxu0 0
        %665 = vmatpush1.bf16.msra.mxu0 0
        %666 = vmatprep.subr.bf16.mxu0 0
        %667 = vmatpush1.bf16.msra.mxu0 0
        %668 = vmatprep.subr.bf16.mxu0 0
        %669 = vmatpush1.bf16.msra.mxu0 0
        %670 = vmatprep.subr.bf16.mxu0 %v654
        %671 = vmatpush1.bf16.msra.mxu0 %v651
        %672 = vmatprep.subr.bf16.mxu0 0
        %673 = vmatpush2.bf16.msra.mxu0 0
        %674 = vmatprep.subr.bf16.mxu0 0
        %675 = vmatpush2.bf16.msra.mxu0 0
        %676 = vmatprep.subr.bf16.mxu0 0
        %677 = vmatpush2.bf16.msra.mxu0 0
        %678 = vmatprep.subr.bf16.mxu0 0
        %679 = vmatpush2.bf16.msra.mxu0 0
        %680 = vmatprep.subr.bf16.mxu0 0
        %681 = vmatpush2.bf16.msra.mxu0 0
        %682 = vmatprep.subr.bf16.mxu0 0
        %683 = vmatpush2.bf16.msra.mxu0 0
        %684 = vmatprep.subr.bf16.mxu0 0
        %685 = vmatpush2.bf16.msra.mxu0 0
        %686 = vmatprep.subr.bf16.mxu0 0
        %687 = vmatpush2.bf16.msra.mxu0 0
        %688 = vmatprep.mubr.bf16.mxu0 0
        %689 = vmatmul.mubr.bf16.gmra.mxu0 %v645
        %v690 = vpop.f32.mrf.mxu0
        %v691 = vadd.f32 0.0, %v690
        %v692 = vpop.f32.mrf.mxu0
        %v693 = vadd.f32 0.0, %v692
        %v694 = vpop.f32.mrf.mxu0
        %v695 = vadd.f32 0.0, %v694
        %v696 = vpop.f32.mrf.mxu0
        %v697 = vadd.f32 0.0, %v696
        %698 = vmatprep.mubr.bf16.mxu0 0
        %699 = vmatmul.mubr.bf16.gmra.mxu0 %v648
        %v700 = vpop.f32.mrf.mxu0
        %v701 = vadd.f32 0.0, %v700
        %v702 = vpop.f32.mrf.mxu0
        %v703 = vadd.f32 0.0, %v702
        %v704 = vpop.f32.mrf.mxu0
        %v705 = vadd.f32 0.0, %v704
        %v706 = vpop.f32.mrf.mxu0
        %v707 = vadd.f32 0.0, %v706
        %708 = vdwg.mxu0
        %v709 = vadd.f32 %v573, %v691
        %v710 = vadd.f32 %v575, %v693
        %v711 = vadd.f32 %v577, %v695
        %v712 = vadd.f32 %v579, %v697
        %v713 = vadd.f32 %v583, %v701
        %v714 = vadd.f32 %v585, %v703
        %v715 = vadd.f32 %v587, %v705
        %v716 = vadd.f32 %v589, %v707
        %s717 = scalar_lea.vmem %s1, 3
        %v718 = vld [vmem:[%s717] ss:$8 sm:$0x3]
        %v720 = vlaneseq
        %v721 = vshrl.u32 %v720, 7
        %v722 = vsub.s32 0, %v721
        %v723 = vrot.slane %v718, %v722
        %v724 = vlaneseq
        %v725 = vshrl.u32 %v724, 7
        %v726 = vsub.s32 1, %v725
        %v727 = vrot.slane %v718, %v726
        %728 = vrot.lane.b32.xlu0 %v723, 127
        %v729 = vpop.permute.xlu0 %728
        %730 = vrot.lane.b32.xlu0 %v727, 127
        %v731 = vpop.permute.xlu0 %730
        %vm732 = vcmask 1039360
        %v733 = vsel %vm732, %v729, %v731
        %v737 = vmul.f32 %v729, 0.0
        %v738 = vmul.f32 %v353, %v733
        %v739 = vmul.f32 %v354, %v731
        %v740 = vpack.c.bf16 %v737, %v737
        %v741 = vpack.c.bf16 %v738, %v738
        %v742 = vpack.c.bf16 %v739, %v739
        %s743 = scalar_lea.vmem %s3, 48
        %v744 = vld [vmem:[%s743] sm:$0xf]
        %v745 = vld [vmem:[%s743 + $0x4] sm:$0xf]
        %v746 = vld [vmem:[%s743 + $0x8] sm:$0xf]
        %v747 = vld [vmem:[%s743 + $0xc] sm:$0xf]
        %v752 = vunpack.c.l.b16 %v744
        %v753 = vunpack.c.l.b16 %v745
        %v754 = vunpack.c.l.b16 %v746
        %v755 = vunpack.c.l.b16 %v747
        %v756 = vpack.c.b16 %v753, %v752
        %v757 = vpack.c.b16 %v755, %v754
        %761 = vrot.lane.b32.xlu0 %v740, 1
        %v762 = vpop.permute.xlu0 %761
        %763 = vrot.lane.b32.xlu0 %v741, 1
        %v764 = vpop.permute.xlu0 %763
        %765 = vrot.lane.b32.xlu0 %v742, 1
        %v766 = vpop.permute.xlu0 %765
        %vm767 = vcmask 7168
        %v768 = vsel %vm767, %v762, %v764
        %v769 = vsel %vm767, %v764, %v766
        %v771 = vsel %vm437, %v756, 0
        %v774 = vsel %vm437, %v757, 0
        %v777 = vsel %vm444, %v768, 0
        %v780 = vsel %vm444, %v769, 0
        %782 = vmatprep.subr.bf16.mxu0 0
        %783 = vmatpush1.bf16.msra.mxu0 0
        %784 = vmatprep.subr.bf16.mxu0 0
        %785 = vmatpush1.bf16.msra.mxu0 0
        %786 = vmatprep.subr.bf16.mxu0 0
        %787 = vmatpush1.bf16.msra.mxu0 0
        %788 = vmatprep.subr.bf16.mxu0 0
        %789 = vmatpush1.bf16.msra.mxu0 0
        %790 = vmatprep.subr.bf16.mxu0 0
        %791 = vmatpush1.bf16.msra.mxu0 0
        %792 = vmatprep.subr.bf16.mxu0 0
        %793 = vmatpush1.bf16.msra.mxu0 0
        %794 = vmatprep.subr.bf16.mxu0 0
        %795 = vmatpush1.bf16.msra.mxu0 0
        %796 = vmatprep.subr.bf16.mxu0 %v780
        %797 = vmatpush1.bf16.msra.mxu0 %v777
        %798 = vmatprep.subr.bf16.mxu0 0
        %799 = vmatpush2.bf16.msra.mxu0 0
        %800 = vmatprep.subr.bf16.mxu0 0
        %801 = vmatpush2.bf16.msra.mxu0 0
        %802 = vmatprep.subr.bf16.mxu0 0
        %803 = vmatpush2.bf16.msra.mxu0 0
        %804 = vmatprep.subr.bf16.mxu0 0
        %805 = vmatpush2.bf16.msra.mxu0 0
        %806 = vmatprep.subr.bf16.mxu0 0
        %807 = vmatpush2.bf16.msra.mxu0 0
        %808 = vmatprep.subr.bf16.mxu0 0
        %809 = vmatpush2.bf16.msra.mxu0 0
        %810 = vmatprep.subr.bf16.mxu0 0
        %811 = vmatpush2.bf16.msra.mxu0 0
        %812 = vmatprep.subr.bf16.mxu0 0
        %813 = vmatpush2.bf16.msra.mxu0 0
        %814 = vmatprep.mubr.bf16.mxu0 0
        %815 = vmatmul.mubr.bf16.gmra.mxu0 %v771
        %v816 = vpop.f32.mrf.mxu0
        %v817 = vadd.f32 0.0, %v816
        %v818 = vpop.f32.mrf.mxu0
        %v819 = vadd.f32 0.0, %v818
        %v820 = vpop.f32.mrf.mxu0
        %v821 = vadd.f32 0.0, %v820
        %v822 = vpop.f32.mrf.mxu0
        %v823 = vadd.f32 0.0, %v822
        %824 = vmatprep.mubr.bf16.mxu0 0
        %825 = vmatmul.mubr.bf16.gmra.mxu0 %v774
        %v826 = vpop.f32.mrf.mxu0
        %v827 = vadd.f32 0.0, %v826
        %v828 = vpop.f32.mrf.mxu0
        %v829 = vadd.f32 0.0, %v828
        %v830 = vpop.f32.mrf.mxu0
        %v831 = vadd.f32 0.0, %v830
        %v832 = vpop.f32.mrf.mxu0
        %v833 = vadd.f32 0.0, %v832
        %834 = vdwg.mxu0
        %v835 = vadd.f32 %v709, %v817
        %v836 = vadd.f32 %v710, %v819
        %v837 = vadd.f32 %v711, %v821
        %v838 = vadd.f32 %v712, %v823
        %v839 = vadd.f32 %v713, %v827
        %v840 = vadd.f32 %v714, %v829
        %v841 = vadd.f32 %v715, %v831
        %v842 = vadd.f32 %v716, %v833
        %s843 = scalar_lea.vmem %s1, 4
        %v844 = vld [vmem:[%s843] ss:$8 sm:$0x3]
        %v846 = vlaneseq
        %v847 = vshrl.u32 %v846, 7
        %v848 = vsub.s32 0, %v847
        %v849 = vrot.slane %v844, %v848
        %v850 = vlaneseq
        %v851 = vshrl.u32 %v850, 7
        %v852 = vsub.s32 1, %v851
        %v853 = vrot.slane %v844, %v852
        %v856 = vmul.f32 %v353, %v849
        %v857 = vmul.f32 %v354, %v853
        %v858 = vpack.c.bf16 %v856, %v856
        %v859 = vpack.c.bf16 %v857, %v857
        %s860 = scalar_lea.vmem %s3, 64
        %v861 = vld [vmem:[%s860] sm:$0xf]
        %v862 = vld [vmem:[%s860 + $0x4] sm:$0xf]
        %v863 = vld [vmem:[%s860 + $0x8] sm:$0xf]
        %v864 = vld [vmem:[%s860 + $0xc] sm:$0xf]
        %v869 = vunpack.c.l.b16 %v861
        %v870 = vunpack.c.l.b16 %v862
        %v871 = vunpack.c.l.b16 %v863
        %v872 = vunpack.c.l.b16 %v864
        %v873 = vpack.c.b16 %v870, %v869
        %v874 = vpack.c.b16 %v872, %v871
        %v876 = vsel %vm437, %v873, 0
        %v879 = vsel %vm437, %v874, 0
        %v882 = vsel %vm444, %v858, 0
        %v885 = vsel %vm444, %v859, 0
        %887 = vmatprep.subr.bf16.mxu0 0
        %888 = vmatpush1.bf16.msra.mxu0 0
        %889 = vmatprep.subr.bf16.mxu0 0
        %890 = vmatpush1.bf16.msra.mxu0 0
        %891 = vmatprep.subr.bf16.mxu0 0
        %892 = vmatpush1.bf16.msra.mxu0 0
        %893 = vmatprep.subr.bf16.mxu0 0
        %894 = vmatpush1.bf16.msra.mxu0 0
        %895 = vmatprep.subr.bf16.mxu0 0
        %896 = vmatpush1.bf16.msra.mxu0 0
        %897 = vmatprep.subr.bf16.mxu0 0
        %898 = vmatpush1.bf16.msra.mxu0 0
        %899 = vmatprep.subr.bf16.mxu0 0
        %900 = vmatpush1.bf16.msra.mxu0 0
        %901 = vmatprep.subr.bf16.mxu0 %v885
        %902 = vmatpush1.bf16.msra.mxu0 %v882
        %903 = vmatprep.subr.bf16.mxu0 0
        %904 = vmatpush2.bf16.msra.mxu0 0
        %905 = vmatprep.subr.bf16.mxu0 0
        %906 = vmatpush2.bf16.msra.mxu0 0
        %907 = vmatprep.subr.bf16.mxu0 0
        %908 = vmatpush2.bf16.msra.mxu0 0
        %909 = vmatprep.subr.bf16.mxu0 0
        %910 = vmatpush2.bf16.msra.mxu0 0
        %911 = vmatprep.subr.bf16.mxu0 0
        %912 = vmatpush2.bf16.msra.mxu0 0
        %913 = vmatprep.subr.bf16.mxu0 0
        %914 = vmatpush2.bf16.msra.mxu0 0
        %915 = vmatprep.subr.bf16.mxu0 0
        %916 = vmatpush2.bf16.msra.mxu0 0
        %917 = vmatprep.subr.bf16.mxu0 0
        %918 = vmatpush2.bf16.msra.mxu0 0
        %919 = vmatprep.mubr.bf16.mxu0 0
        %920 = vmatmul.mubr.bf16.gmra.mxu0 %v876
        %v921 = vpop.f32.mrf.mxu0
        %v922 = vadd.f32 0.0, %v921
        %v923 = vpop.f32.mrf.mxu0
        %v924 = vadd.f32 0.0, %v923
        %v925 = vpop.f32.mrf.mxu0
        %v926 = vadd.f32 0.0, %v925
        %v927 = vpop.f32.mrf.mxu0
        %v928 = vadd.f32 0.0, %v927
        %929 = vmatprep.mubr.bf16.mxu0 0
        %930 = vmatmul.mubr.bf16.gmra.mxu0 %v879
        %v931 = vpop.f32.mrf.mxu0
        %v932 = vadd.f32 0.0, %v931
        %v933 = vpop.f32.mrf.mxu0
        %v934 = vadd.f32 0.0, %v933
        %v935 = vpop.f32.mrf.mxu0
        %v936 = vadd.f32 0.0, %v935
        %v937 = vpop.f32.mrf.mxu0
        %v938 = vadd.f32 0.0, %v937
        %939 = vdwg.mxu0
        %v940 = vadd.f32 %v835, %v922
        %v941 = vadd.f32 %v836, %v924
        %v942 = vadd.f32 %v837, %v926
        %v943 = vadd.f32 %v838, %v928
        %v944 = vadd.f32 %v839, %v932
        %v945 = vadd.f32 %v840, %v934
        %v946 = vadd.f32 %v841, %v936
        %v947 = vadd.f32 %v842, %v938
        %s948 = scalar_lea.vmem %s1, 5
        %v949 = vld [vmem:[%s948] ss:$8 sm:$0x3]
        %v951 = vlaneseq
        %v952 = vshrl.u32 %v951, 7
        %v953 = vsub.s32 0, %v952
        %v954 = vrot.slane %v949, %v953
        %v955 = vlaneseq
        %v956 = vshrl.u32 %v955, 7
        %v957 = vsub.s32 1, %v956
        %v958 = vrot.slane %v949, %v957
        %959 = vrot.lane.b32.xlu0 %v954, 1
        %v960 = vpop.permute.xlu0 %959
        %961 = vrot.lane.b32.xlu0 %v958, 1
        %v962 = vpop.permute.xlu0 %961
        %vm963 = vcmask 7168
        %v964 = vsel %vm963, %v960, %v962
        %v968 = vmul.f32 %v353, %v960
        %v969 = vmul.f32 %v354, %v964
        %v970 = vmul.f32 %v962, 0.0
        %v971 = vpack.c.bf16 %v968, %v968
        %v972 = vpack.c.bf16 %v969, %v969
        %v973 = vpack.c.bf16 %v970, %v970
        %s974 = scalar_lea.vmem %s3, 80
        %v975 = vld [vmem:[%s974] sm:$0xf]
        %v976 = vld [vmem:[%s974 + $0x4] sm:$0xf]
        %v977 = vld [vmem:[%s974 + $0x8] sm:$0xf]
        %v978 = vld [vmem:[%s974 + $0xc] sm:$0xf]
        %v983 = vunpack.c.l.b16 %v975
        %v984 = vunpack.c.l.b16 %v976
        %v985 = vunpack.c.l.b16 %v977
        %v986 = vunpack.c.l.b16 %v978
        %v987 = vpack.c.b16 %v984, %v983
        %v988 = vpack.c.b16 %v986, %v985
        %992 = vrot.lane.b32.xlu0 %v971, 127
        %v993 = vpop.permute.xlu0 %992
        %994 = vrot.lane.b32.xlu0 %v972, 127
        %v995 = vpop.permute.xlu0 %994
        %996 = vrot.lane.b32.xlu0 %v973, 127
        %v997 = vpop.permute.xlu0 %996
        %vm998 = vcmask 1039360
        %v999 = vsel %vm998, %v993, %v995
        %v1000 = vsel %vm998, %v995, %v997
        %v1002 = vsel %vm437, %v987, 0
        %v1005 = vsel %vm437, %v988, 0
        %v1008 = vsel %vm444, %v999, 0
        %v1011 = vsel %vm444, %v1000, 0
        %1013 = vmatprep.subr.bf16.mxu0 0
        %1014 = vmatpush1.bf16.msra.mxu0 0
        %1015 = vmatprep.subr.bf16.mxu0 0
        %1016 = vmatpush1.bf16.msra.mxu0 0
        %1017 = vmatprep.subr.bf16.mxu0 0
        %1018 = vmatpush1.bf16.msra.mxu0 0
        %1019 = vmatprep.subr.bf16.mxu0 0
        %1020 = vmatpush1.bf16.msra.mxu0 0
        %1021 = vmatprep.subr.bf16.mxu0 0
        %1022 = vmatpush1.bf16.msra.mxu0 0
        %1023 = vmatprep.subr.bf16.mxu0 0
        %1024 = vmatpush1.bf16.msra.mxu0 0
        %1025 = vmatprep.subr.bf16.mxu0 0
        %1026 = vmatpush1.bf16.msra.mxu0 0
        %1027 = vmatprep.subr.bf16.mxu0 %v1011
        %1028 = vmatpush1.bf16.msra.mxu0 %v1008
        %1029 = vmatprep.subr.bf16.mxu0 0
        %1030 = vmatpush2.bf16.msra.mxu0 0
        %1031 = vmatprep.subr.bf16.mxu0 0
        %1032 = vmatpush2.bf16.msra.mxu0 0
        %1033 = vmatprep.subr.bf16.mxu0 0
        %1034 = vmatpush2.bf16.msra.mxu0 0
        %1035 = vmatprep.subr.bf16.mxu0 0
        %1036 = vmatpush2.bf16.msra.mxu0 0
        %1037 = vmatprep.subr.bf16.mxu0 0
        %1038 = vmatpush2.bf16.msra.mxu0 0
        %1039 = vmatprep.subr.bf16.mxu0 0
        %1040 = vmatpush2.bf16.msra.mxu0 0
        %1041 = vmatprep.subr.bf16.mxu0 0
        %1042 = vmatpush2.bf16.msra.mxu0 0
        %1043 = vmatprep.subr.bf16.mxu0 0
        %1044 = vmatpush2.bf16.msra.mxu0 0
        %1045 = vmatprep.mubr.bf16.mxu0 0
        %1046 = vmatmul.mubr.bf16.gmra.mxu0 %v1002
        %v1047 = vpop.f32.mrf.mxu0
        %v1048 = vadd.f32 0.0, %v1047
        %v1049 = vpop.f32.mrf.mxu0
        %v1050 = vadd.f32 0.0, %v1049
        %v1051 = vpop.f32.mrf.mxu0
        %v1052 = vadd.f32 0.0, %v1051
        %v1053 = vpop.f32.mrf.mxu0
        %v1054 = vadd.f32 0.0, %v1053
        %1055 = vmatprep.mubr.bf16.mxu0 0
        %1056 = vmatmul.mubr.bf16.gmra.mxu0 %v1005
        %v1057 = vpop.f32.mrf.mxu0
        %v1058 = vadd.f32 0.0, %v1057
        %v1059 = vpop.f32.mrf.mxu0
        %v1060 = vadd.f32 0.0, %v1059
        %v1061 = vpop.f32.mrf.mxu0
        %v1062 = vadd.f32 0.0, %v1061
        %v1063 = vpop.f32.mrf.mxu0
        %v1064 = vadd.f32 0.0, %v1063
        %1065 = vdwg.mxu0
        %v1066 = vadd.f32 %v940, %v1048
        %v1067 = vadd.f32 %v941, %v1050
        %v1068 = vadd.f32 %v942, %v1052
        %v1069 = vadd.f32 %v943, %v1054
        %v1070 = vadd.f32 %v944, %v1058
        %v1071 = vadd.f32 %v945, %v1060
        %v1072 = vadd.f32 %v946, %v1062
        %v1073 = vadd.f32 %v947, %v1064
        %s1074 = scalar_lea.vmem %s1, 6
        %v1075 = vld [vmem:[%s1074] ss:$8 sm:$0x3]
        %v1077 = vlaneseq
        %v1078 = vshrl.u32 %v1077, 7
        %v1079 = vsub.s32 0, %v1078
        %v1080 = vrot.slane %v1075, %v1079
        %v1081 = vlaneseq
        %v1082 = vshrl.u32 %v1081, 7
        %v1083 = vsub.s32 1, %v1082
        %v1084 = vrot.slane %v1075, %v1083
        %1085 = vrot.lane.b32.xlu0 %v1080, 15
        %v1086 = vpop.permute.xlu0 %1085
        %1087 = vrot.lane.b32.xlu0 %v1084, 15
        %v1088 = vpop.permute.xlu0 %1087
        %vm1089 = vcmask 121856
        %v1090 = vsel %vm1089, %v1086, %v1088
        %v1094 = vmul.f32 %v353, %v1086
        %v1095 = vmul.f32 %v354, %v1090
        %v1096 = vmul.f32 %v1088, 0.0
        %v1097 = vpack.c.bf16 %v1094, %v1094
        %v1098 = vpack.c.bf16 %v1095, %v1095
        %v1099 = vpack.c.bf16 %v1096, %v1096
        %s1100 = scalar_lea.vmem %s3, 96
        %v1101 = vld [vmem:[%s1100] sm:$0xf]
        %v1102 = vld [vmem:[%s1100 + $0x4] sm:$0xf]
        %v1103 = vld [vmem:[%s1100 + $0x8] sm:$0xf]
        %v1104 = vld [vmem:[%s1100 + $0xc] sm:$0xf]
        %v1109 = vunpack.c.l.b16 %v1101
        %v1110 = vunpack.c.l.b16 %v1102
        %v1111 = vunpack.c.l.b16 %v1103
        %v1112 = vunpack.c.l.b16 %v1104
        %v1113 = vpack.c.b16 %v1110, %v1109
        %v1114 = vpack.c.b16 %v1112, %v1111
        %1118 = vrot.lane.b32.xlu0 %v1097, 113
        %v1119 = vpop.permute.xlu0 %1118
        %1120 = vrot.lane.b32.xlu0 %v1098, 113
        %v1121 = vpop.permute.xlu0 %1120
        %1122 = vrot.lane.b32.xlu0 %v1099, 113
        %v1123 = vpop.permute.xlu0 %1122
        %vm1124 = vcmask 924672
        %v1125 = vsel %vm1124, %v1119, %v1121
        %v1126 = vsel %vm1124, %v1121, %v1123
        %v1128 = vsel %vm437, %v1113, 0
        %v1131 = vsel %vm437, %v1114, 0
        %v1134 = vsel %vm444, %v1125, 0
        %v1137 = vsel %vm444, %v1126, 0
        %1139 = vmatprep.subr.bf16.mxu0 0
        %1140 = vmatpush1.bf16.msra.mxu0 0
        %1141 = vmatprep.subr.bf16.mxu0 0
        %1142 = vmatpush1.bf16.msra.mxu0 0
        %1143 = vmatprep.subr.bf16.mxu0 0
        %1144 = vmatpush1.bf16.msra.mxu0 0
        %1145 = vmatprep.subr.bf16.mxu0 0
        %1146 = vmatpush1.bf16.msra.mxu0 0
        %1147 = vmatprep.subr.bf16.mxu0 0
        %1148 = vmatpush1.bf16.msra.mxu0 0
        %1149 = vmatprep.subr.bf16.mxu0 0
        %1150 = vmatpush1.bf16.msra.mxu0 0
        %1151 = vmatprep.subr.bf16.mxu0 0
        %1152 = vmatpush1.bf16.msra.mxu0 0
        %1153 = vmatprep.subr.bf16.mxu0 %v1137
        %1154 = vmatpush1.bf16.msra.mxu0 %v1134
        %1155 = vmatprep.subr.bf16.mxu0 0
        %1156 = vmatpush2.bf16.msra.mxu0 0
        %1157 = vmatprep.subr.bf16.mxu0 0
        %1158 = vmatpush2.bf16.msra.mxu0 0
        %1159 = vmatprep.subr.bf16.mxu0 0
        %1160 = vmatpush2.bf16.msra.mxu0 0
        %1161 = vmatprep.subr.bf16.mxu0 0
        %1162 = vmatpush2.bf16.msra.mxu0 0
        %1163 = vmatprep.subr.bf16.mxu0 0
        %1164 = vmatpush2.bf16.msra.mxu0 0
        %1165 = vmatprep.subr.bf16.mxu0 0
        %1166 = vmatpush2.bf16.msra.mxu0 0
        %1167 = vmatprep.subr.bf16.mxu0 0
        %1168 = vmatpush2.bf16.msra.mxu0 0
        %1169 = vmatprep.subr.bf16.mxu0 0
        %1170 = vmatpush2.bf16.msra.mxu0 0
        %1171 = vmatprep.mubr.bf16.mxu0 0
        %1172 = vmatmul.mubr.bf16.gmra.mxu0 %v1128
        %v1173 = vpop.f32.mrf.mxu0
        %v1174 = vadd.f32 0.0, %v1173
        %v1175 = vpop.f32.mrf.mxu0
        %v1176 = vadd.f32 0.0, %v1175
        %v1177 = vpop.f32.mrf.mxu0
        %v1178 = vadd.f32 0.0, %v1177
        %v1179 = vpop.f32.mrf.mxu0
        %v1180 = vadd.f32 0.0, %v1179
        %1181 = vmatprep.mubr.bf16.mxu0 0
        %1182 = vmatmul.mubr.bf16.gmra.mxu0 %v1131
        %v1183 = vpop.f32.mrf.mxu0
        %v1184 = vadd.f32 0.0, %v1183
        %v1185 = vpop.f32.mrf.mxu0
        %v1186 = vadd.f32 0.0, %v1185
        %v1187 = vpop.f32.mrf.mxu0
        %v1188 = vadd.f32 0.0, %v1187
        %v1189 = vpop.f32.mrf.mxu0
        %v1190 = vadd.f32 0.0, %v1189
        %1191 = vdwg.mxu0
        %v1192 = vadd.f32 %v1066, %v1174
        %v1193 = vadd.f32 %v1067, %v1176
        %v1194 = vadd.f32 %v1068, %v1178
        %v1195 = vadd.f32 %v1069, %v1180
        %v1196 = vadd.f32 %v1070, %v1184
        %v1197 = vadd.f32 %v1071, %v1186
        %v1198 = vadd.f32 %v1072, %v1188
        %v1199 = vadd.f32 %v1073, %v1190
        %s1200 = scalar_lea.vmem %s1, 7
        %v1201 = vld [vmem:[%s1200] ss:$8 sm:$0x3]
        %v1203 = vlaneseq
        %v1204 = vshrl.u32 %v1203, 7
        %v1205 = vsub.s32 0, %v1204
        %v1206 = vrot.slane %v1201, %v1205
        %v1207 = vlaneseq
        %v1208 = vshrl.u32 %v1207, 7
        %v1209 = vsub.s32 1, %v1208
        %v1210 = vrot.slane %v1201, %v1209
        %1211 = vrot.lane.b32.xlu0 %v1206, 16
        %v1212 = vpop.permute.xlu0 %1211
        %1213 = vrot.lane.b32.xlu0 %v1210, 16
        %v1214 = vpop.permute.xlu0 %1213
        %vm1215 = vcmask 130048
        %v1216 = vsel %vm1215, %v1212, %v1214
        %v1220 = vmul.f32 %v353, %v1212
        %v1221 = vmul.f32 %v354, %v1216
        %v1222 = vmul.f32 %v1214, 0.0
        %v1223 = vpack.c.bf16 %v1220, %v1220
        %v1224 = vpack.c.bf16 %v1221, %v1221
        %v1225 = vpack.c.bf16 %v1222, %v1222
        %s1226 = scalar_lea.vmem %s3, 112
        %v1227 = vld [vmem:[%s1226] sm:$0xf]
        %v1228 = vld [vmem:[%s1226 + $0x4] sm:$0xf]
        %v1229 = vld [vmem:[%s1226 + $0x8] sm:$0xf]
        %v1230 = vld [vmem:[%s1226 + $0xc] sm:$0xf]
        %v1235 = vunpack.c.l.b16 %v1227
        %v1236 = vunpack.c.l.b16 %v1228
        %v1237 = vunpack.c.l.b16 %v1229
        %v1238 = vunpack.c.l.b16 %v1230
        %v1239 = vpack.c.b16 %v1236, %v1235
        %v1240 = vpack.c.b16 %v1238, %v1237
        %1244 = vrot.lane.b32.xlu0 %v1223, 112
        %v1245 = vpop.permute.xlu0 %1244
        %1246 = vrot.lane.b32.xlu0 %v1224, 112
        %v1247 = vpop.permute.xlu0 %1246
        %1248 = vrot.lane.b32.xlu0 %v1225, 112
        %v1249 = vpop.permute.xlu0 %1248
        %vm1250 = vcmask 916480
        %v1251 = vsel %vm1250, %v1245, %v1247
        %v1252 = vsel %vm1250, %v1247, %v1249
        %v1254 = vsel %vm437, %v1239, 0
        %v1257 = vsel %vm437, %v1240, 0
        %v1260 = vsel %vm444, %v1251, 0
        %v1263 = vsel %vm444, %v1252, 0
        %1265 = vmatprep.subr.bf16.mxu0 0
        %1266 = vmatpush1.bf16.msra.mxu0 0
        %1267 = vmatprep.subr.bf16.mxu0 0
        %1268 = vmatpush1.bf16.msra.mxu0 0
        %1269 = vmatprep.subr.bf16.mxu0 0
        %1270 = vmatpush1.bf16.msra.mxu0 0
        %1271 = vmatprep.subr.bf16.mxu0 0
        %1272 = vmatpush1.bf16.msra.mxu0 0
        %1273 = vmatprep.subr.bf16.mxu0 0
        %1274 = vmatpush1.bf16.msra.mxu0 0
        %1275 = vmatprep.subr.bf16.mxu0 0
        %1276 = vmatpush1.bf16.msra.mxu0 0
        %1277 = vmatprep.subr.bf16.mxu0 0
        %1278 = vmatpush1.bf16.msra.mxu0 0
        %1279 = vmatprep.subr.bf16.mxu0 %v1263
        %1280 = vmatpush1.bf16.msra.mxu0 %v1260
        %1281 = vmatprep.subr.bf16.mxu0 0
        %1282 = vmatpush2.bf16.msra.mxu0 0
        %1283 = vmatprep.subr.bf16.mxu0 0
        %1284 = vmatpush2.bf16.msra.mxu0 0
        %1285 = vmatprep.subr.bf16.mxu0 0
        %1286 = vmatpush2.bf16.msra.mxu0 0
        %1287 = vmatprep.subr.bf16.mxu0 0
        %1288 = vmatpush2.bf16.msra.mxu0 0
        %1289 = vmatprep.subr.bf16.mxu0 0
        %1290 = vmatpush2.bf16.msra.mxu0 0
        %1291 = vmatprep.subr.bf16.mxu0 0
        %1292 = vmatpush2.bf16.msra.mxu0 0
        %1293 = vmatprep.subr.bf16.mxu0 0
        %1294 = vmatpush2.bf16.msra.mxu0 0
        %1295 = vmatprep.subr.bf16.mxu0 0
        %1296 = vmatpush2.bf16.msra.mxu0 0
        %1297 = vmatprep.mubr.bf16.mxu0 0
        %1298 = vmatmul.mubr.bf16.gmra.mxu0 %v1254
        %v1299 = vpop.f32.mrf.mxu0
        %v1300 = vadd.f32 0.0, %v1299
        %v1301 = vpop.f32.mrf.mxu0
        %v1302 = vadd.f32 0.0, %v1301
        %v1303 = vpop.f32.mrf.mxu0
        %v1304 = vadd.f32 0.0, %v1303
        %v1305 = vpop.f32.mrf.mxu0
        %v1306 = vadd.f32 0.0, %v1305
        %1307 = vmatprep.mubr.bf16.mxu0 0
        %1308 = vmatmul.mubr.bf16.gmra.mxu0 %v1257
        %v1309 = vpop.f32.mrf.mxu0
        %v1310 = vadd.f32 0.0, %v1309
        %v1311 = vpop.f32.mrf.mxu0
        %v1312 = vadd.f32 0.0, %v1311
        %v1313 = vpop.f32.mrf.mxu0
        %v1314 = vadd.f32 0.0, %v1313
        %v1315 = vpop.f32.mrf.mxu0
        %v1316 = vadd.f32 0.0, %v1315
        %1317 = vdwg.mxu0
        %v1318 = vadd.f32 %v1192, %v1300
        %v1319 = vadd.f32 %v1193, %v1302
        %v1320 = vadd.f32 %v1194, %v1304
        %v1321 = vadd.f32 %v1195, %v1306
        %v1322 = vadd.f32 %v1196, %v1310
        %v1323 = vadd.f32 %v1197, %v1312
        %v1324 = vadd.f32 %v1198, %v1314
        %v1325 = vadd.f32 %v1199, %v1316
        %s1326 = scalar_lea.vmem %s1, 16
        %v1327 = vld [vmem:[%s1326] ss:$8 sm:$0x3]
        %v1329 = vlaneseq
        %v1330 = vshrl.u32 %v1329, 7
        %v1331 = vsub.s32 0, %v1330
        %v1332 = vrot.slane %v1327, %v1331
        %v1333 = vlaneseq
        %v1334 = vshrl.u32 %v1333, 7
        %v1335 = vsub.s32 1, %v1334
        %v1336 = vrot.slane %v1327, %v1335
        %1337 = vrot.lane.b32.xlu0 %v1332, 17
        %v1338 = vpop.permute.xlu0 %1337
        %1339 = vrot.lane.b32.xlu0 %v1336, 17
        %v1340 = vpop.permute.xlu0 %1339
        %vm1341 = vcmask 138240
        %v1342 = vsel %vm1341, %v1338, %v1340
        %v1346 = vmul.f32 %v353, %v1338
        %v1347 = vmul.f32 %v354, %v1342
        %v1348 = vmul.f32 %v1340, 0.0
        %v1349 = vpack.c.bf16 %v1346, %v1346
        %v1350 = vpack.c.bf16 %v1347, %v1347
        %v1351 = vpack.c.bf16 %v1348, %v1348
        %s1352 = scalar_lea.vmem %s3, 128
        %v1353 = vld [vmem:[%s1352] sm:$0xf]
        %v1354 = vld [vmem:[%s1352 + $0x4] sm:$0xf]
        %v1355 = vld [vmem:[%s1352 + $0x8] sm:$0xf]
        %v1356 = vld [vmem:[%s1352 + $0xc] sm:$0xf]
        %v1361 = vunpack.c.l.b16 %v1353
        %v1362 = vunpack.c.l.b16 %v1354
        %v1363 = vunpack.c.l.b16 %v1355
        %v1364 = vunpack.c.l.b16 %v1356
        %v1365 = vpack.c.b16 %v1362, %v1361
        %v1366 = vpack.c.b16 %v1364, %v1363
        %1370 = vrot.lane.b32.xlu0 %v1349, 111
        %v1371 = vpop.permute.xlu0 %1370
        %1372 = vrot.lane.b32.xlu0 %v1350, 111
        %v1373 = vpop.permute.xlu0 %1372
        %1374 = vrot.lane.b32.xlu0 %v1351, 111
        %v1375 = vpop.permute.xlu0 %1374
        %vm1376 = vcmask 908288
        %v1377 = vsel %vm1376, %v1371, %v1373
        %v1378 = vsel %vm1376, %v1373, %v1375
        %v1380 = vsel %vm437, %v1365, 0
        %v1383 = vsel %vm437, %v1366, 0
        %v1386 = vsel %vm444, %v1377, 0
        %v1389 = vsel %vm444, %v1378, 0
        %1391 = vmatprep.subr.bf16.mxu0 0
        %1392 = vmatpush1.bf16.msra.mxu0 0
        %1393 = vmatprep.subr.bf16.mxu0 0
        %1394 = vmatpush1.bf16.msra.mxu0 0
        %1395 = vmatprep.subr.bf16.mxu0 0
        %1396 = vmatpush1.bf16.msra.mxu0 0
        %1397 = vmatprep.subr.bf16.mxu0 0
        %1398 = vmatpush1.bf16.msra.mxu0 0
        %1399 = vmatprep.subr.bf16.mxu0 0
        %1400 = vmatpush1.bf16.msra.mxu0 0
        %1401 = vmatprep.subr.bf16.mxu0 0
        %1402 = vmatpush1.bf16.msra.mxu0 0
        %1403 = vmatprep.subr.bf16.mxu0 0
        %1404 = vmatpush1.bf16.msra.mxu0 0
        %1405 = vmatprep.subr.bf16.mxu0 %v1389
        %1406 = vmatpush1.bf16.msra.mxu0 %v1386
        %1407 = vmatprep.subr.bf16.mxu0 0
        %1408 = vmatpush2.bf16.msra.mxu0 0
        %1409 = vmatprep.subr.bf16.mxu0 0
        %1410 = vmatpush2.bf16.msra.mxu0 0
        %1411 = vmatprep.subr.bf16.mxu0 0
        %1412 = vmatpush2.bf16.msra.mxu0 0
        %1413 = vmatprep.subr.bf16.mxu0 0
        %1414 = vmatpush2.bf16.msra.mxu0 0
        %1415 = vmatprep.subr.bf16.mxu0 0
        %1416 = vmatpush2.bf16.msra.mxu0 0
        %1417 = vmatprep.subr.bf16.mxu0 0
        %1418 = vmatpush2.bf16.msra.mxu0 0
        %1419 = vmatprep.subr.bf16.mxu0 0
        %1420 = vmatpush2.bf16.msra.mxu0 0
        %1421 = vmatprep.subr.bf16.mxu0 0
        %1422 = vmatpush2.bf16.msra.mxu0 0
        %1423 = vmatprep.mubr.bf16.mxu0 0
        %1424 = vmatmul.mubr.bf16.gmra.mxu0 %v1380
        %v1425 = vpop.f32.mrf.mxu0
        %v1426 = vadd.f32 0.0, %v1425
        %v1427 = vpop.f32.mrf.mxu0
        %v1428 = vadd.f32 0.0, %v1427
        %v1429 = vpop.f32.mrf.mxu0
        %v1430 = vadd.f32 0.0, %v1429
        %v1431 = vpop.f32.mrf.mxu0
        %v1432 = vadd.f32 0.0, %v1431
        %1433 = vmatprep.mubr.bf16.mxu0 0
        %1434 = vmatmul.mubr.bf16.gmra.mxu0 %v1383
        %v1435 = vpop.f32.mrf.mxu0
        %v1436 = vadd.f32 0.0, %v1435
        %v1437 = vpop.f32.mrf.mxu0
        %v1438 = vadd.f32 0.0, %v1437
        %v1439 = vpop.f32.mrf.mxu0
        %v1440 = vadd.f32 0.0, %v1439
        %v1441 = vpop.f32.mrf.mxu0
        %v1442 = vadd.f32 0.0, %v1441
        %1443 = vdwg.mxu0
        %v1444 = vadd.f32 %v1318, %v1426
        %v1445 = vadd.f32 %v1319, %v1428
        %v1446 = vadd.f32 %v1320, %v1430
        %v1447 = vadd.f32 %v1321, %v1432
        %v1448 = vadd.f32 %v1322, %v1436
        %v1449 = vadd.f32 %v1323, %v1438
        %v1450 = vadd.f32 %v1324, %v1440
        %v1451 = vadd.f32 %v1325, %v1442
        %v1452 = vld [vmem:[%s4] sm:$0xff]
        %v1453 = vld [vmem:[%s4 + $0x8] sm:$0xff]
        %v1454 = vld [vmem:[%s4 + $0x10] sm:$0xff]
        %v1455 = vld [vmem:[%s4 + $0x18] sm:$0xff]
        %1457 = vset.pattern.permute.xlu0 0
        %1458 = vperm.xlu0 %1457, %v1452
        %v1459 = vpop.permute.xlu0 %1458
        %1462 = vset.pattern.permute.xlu0 0
        %1463 = vperm.xlu0 %1462, %v1453
        %v1464 = vpop.permute.xlu0 %1463
        %1467 = vset.pattern.permute.xlu0 0
        %1468 = vperm.xlu0 %1467, %v1454
        %v1469 = vpop.permute.xlu0 %1468
        %1472 = vset.pattern.permute.xlu0 0
        %1473 = vperm.xlu0 %1472, %v1455
        %v1474 = vpop.permute.xlu0 %1473
        %v1476 = vmul.f32 %v1444, %v1459
        %v1477 = vmul.f32 %v1445, %v1459
        %v1478 = vmul.f32 %v1446, %v1464
        %v1479 = vmul.f32 %v1447, %v1464
        %v1480 = vmul.f32 %v1448, %v1469
        %v1481 = vmul.f32 %v1449, %v1469
        %v1482 = vmul.f32 %v1450, %v1474
        %v1483 = vmul.f32 %v1451, %v1474
        %v1484 = vld [vmem:[%s5] sm:$0xff]
        %v1485 = vld [vmem:[%s5 + $0x8] sm:$0xff]
        %v1486 = vld [vmem:[%s5 + $0x10] sm:$0xff]
        %v1487 = vld [vmem:[%s5 + $0x18] sm:$0xff]
        %1489 = vset.pattern.permute.xlu0 0
        %1490 = vperm.xlu0 %1489, %v1484
        %v1491 = vpop.permute.xlu0 %1490
        %1494 = vset.pattern.permute.xlu0 0
        %1495 = vperm.xlu0 %1494, %v1485
        %v1496 = vpop.permute.xlu0 %1495
        %1499 = vset.pattern.permute.xlu0 0
        %1500 = vperm.xlu0 %1499, %v1486
        %v1501 = vpop.permute.xlu0 %1500
        %1504 = vset.pattern.permute.xlu0 0
        %1505 = vperm.xlu0 %1504, %v1487
        %v1506 = vpop.permute.xlu0 %1505
        %v1508 = vadd.f32 %v1476, %v1491
        %v1509 = vadd.f32 %v1477, %v1491
        %v1510 = vadd.f32 %v1478, %v1496
        %v1511 = vadd.f32 %v1479, %v1496
        %v1512 = vadd.f32 %v1480, %v1501
        %v1513 = vadd.f32 %v1481, %v1501
        %v1514 = vadd.f32 %v1482, %v1506
        %v1515 = vadd.f32 %v1483, %v1506
        %vm1516 = vcmp.ge.f32.partialorder %v1508, 0.0
        %vm1517 = vcmp.ge.f32.partialorder %v1509, 0.0
        %vm1518 = vcmp.ge.f32.partialorder %v1510, 0.0
        %vm1519 = vcmp.ge.f32.partialorder %v1511, 0.0
        %vm1520 = vcmp.ge.f32.partialorder %v1512, 0.0
        %vm1521 = vcmp.ge.f32.partialorder %v1513, 0.0
        %vm1522 = vcmp.ge.f32.partialorder %v1514, 0.0
        %vm1523 = vcmp.ge.f32.partialorder %v1515, 0.0
        %v1524 = vstv %s350
        %v1525 = vmul.f32 %v1524, %v1508
        %v1526 = vmul.f32 %v1524, %v1509
        %v1527 = vmul.f32 %v1524, %v1510
        %v1528 = vmul.f32 %v1524, %v1511
        %v1529 = vmul.f32 %v1524, %v1512
        %v1530 = vmul.f32 %v1524, %v1513
        %v1531 = vmul.f32 %v1524, %v1514
        %v1532 = vmul.f32 %v1524, %v1515
        %v1533 = vsel %vm1516, %v1508, %v1525
        %v1534 = vsel %vm1517, %v1509, %v1526
        %v1535 = vsel %vm1518, %v1510, %v1527
        %v1536 = vsel %vm1519, %v1511, %v1528
        %v1537 = vsel %vm1520, %v1512, %v1529
        %v1538 = vsel %vm1521, %v1513, %v1530
        %v1539 = vsel %vm1522, %v1514, %v1531
        %v1540 = vsel %vm1523, %v1515, %v1532
        %v1542 = vlaneseq
        %v1543 = vshrl.u32 %v1542, 7
        %v1544 = vsub.s32 0, %v1543
        %v1545 = vrot.slane %v349, %v1544
        %v1546 = vlaneseq
        %v1547 = vshrl.u32 %v1546, 7
        %v1548 = vsub.s32 1, %v1547
        %v1549 = vrot.slane %v349, %v1548
        %v1552 = vmul.f32 %v1533, %v1545
        %v1553 = vmul.f32 %v1534, %v1549
        %v1554 = vmul.f32 %v1535, %v1545
        %v1555 = vmul.f32 %v1536, %v1549
        %v1556 = vmul.f32 %v1537, %v1545
        %v1557 = vmul.f32 %v1538, %v1549
        %v1558 = vmul.f32 %v1539, %v1545
        %v1559 = vmul.f32 %v1540, %v1549
        %v1560 = vpack.c.bf16 %v1554, %v1552
        %v1561 = vpack.c.bf16 %v1555, %v1553
        %v1562 = vpack.c.bf16 %v1558, %v1556
        %v1563 = vpack.c.bf16 %v1559, %v1557
        %1564 = vmatprep.subr.bf16.mxu0 0
        %1565 = vmatpush1.bf16.xpose.msra.mxu0 0
        %1566 = vmatprep.subr.bf16.mxu0 0
        %1567 = vmatpush1.bf16.xpose.msra.mxu0 0
        %1568 = vmatprep.subr.bf16.mxu0 0
        %1569 = vmatpush1.bf16.xpose.msra.mxu0 0
        %1570 = vmatprep.subr.bf16.mxu0 0
        %1571 = vmatpush1.bf16.xpose.msra.mxu0 0
        %1572 = vmatprep.subr.bf16.mxu0 0
        %1573 = vmatpush1.bf16.xpose.msra.mxu0 0
        %1574 = vmatprep.subr.bf16.mxu0 0
        %1575 = vmatpush1.bf16.xpose.msra.mxu0 0
        %1576 = vmatprep.subr.bf16.mxu0 %v1563
        %1577 = vmatpush1.bf16.xpose.msra.mxu0 %v1562
        %1578 = vmatprep.subr.bf16.mxu0 %v1561
        %1579 = vmatpush1.bf16.xpose.msra.mxu0 %v1560
        %1580 = vmatprep.subr.bf16.mxu0 0
        %1581 = vmatpush2.bf16.xpose.msra.mxu0 0
        %1582 = vmatprep.subr.bf16.mxu0 0
        %1583 = vmatpush2.bf16.xpose.msra.mxu0 0
        %1584 = vmatprep.subr.bf16.mxu0 0
        %1585 = vmatpush2.bf16.xpose.msra.mxu0 0
        %1586 = vmatprep.subr.bf16.mxu0 0
        %1587 = vmatpush2.bf16.xpose.msra.mxu0 0
        %1588 = vmatprep.subr.bf16.mxu0 0
        %1589 = vmatpush2.bf16.xpose.msra.mxu0 0
        %1590 = vmatprep.subr.bf16.mxu0 0
        %1591 = vmatpush2.bf16.xpose.msra.mxu0 0
        %1592 = vmatprep.subr.bf16.mxu0 0
        %1593 = vmatpush2.bf16.xpose.msra.mxu0 0
        %1594 = vmatprep.subr.bf16.mxu0 0
        %1595 = vmatpush2.bf16.xpose.msra.mxu0 0
        %1596 = vmatprep.mubr.bf16.mxu0 %v1561
        %1597 = vmatmul.mubr.bf16.gmra.mxu0 %v1560
        %v1598 = vpop.f32.mrf.mxu0
        %v1599 = vadd.f32 0.0, %v1598
        %v1600 = vpop.f32.mrf.mxu0
        %v1601 = vpop.f32.mrf.mxu0
        %v1602 = vadd.f32 0.0, %v1601
        %v1603 = vpop.f32.mrf.mxu0
        %1604 = vmatprep.mubr.bf16.mxu0 %v1563
        %1605 = vmatmul.mubr.bf16.gmra.mxu0 %v1562
        %v1606 = vpop.f32.mrf.mxu0
        %v1607 = vadd.f32 0.0, %v1606
        %v1608 = vpop.f32.mrf.mxu0
        %v1609 = vpop.f32.mrf.mxu0
        %v1610 = vadd.f32 0.0, %v1609
        %v1611 = vpop.f32.mrf.mxu0
        %1612 = vdwg.mxu0
        %vm1613 = vcmask 261120
        %v1614 = vsel %vm1613, %v1599, inf
        %1615 = vmin.xlane.f32.xlu0 %v1614
        %v1616 = vpop.xlane.xlu0 %1615
        %v1617 = vsel %vm1613, %v1602, inf
        %1618 = vmin.xlane.f32.xlu0 %v1617
        %v1619 = vpop.xlane.xlu0 %1618
        %v1620 = vsel %vm1613, %v1607, inf
        %1621 = vmin.xlane.f32.xlu0 %v1620
        %v1622 = vpop.xlane.xlu0 %1621
        %v1623 = vsel %vm1613, %v1610, inf
        %1624 = vmin.xlane.f32.xlu0 %v1623
        %v1625 = vpop.xlane.xlu0 %1624
        %v1626 = vsub.f32 %v1616, %v1599
        %v1627 = vsub.f32 %v1619, %v1602
        %v1628 = vsub.f32 %v1622, %v1607
        %v1629 = vsub.f32 %v1625, %v1610
        %v1630 = vmul.f32 %v1626, 1.442695
        %v1631 = vpow.pop %v1630
        %v1632 = vmul.f32 %v1627, 1.442695
        %v1633 = vpow.pop %v1632
        %v1634 = vmul.f32 %v1628, 1.442695
        %v1635 = vpow.pop %v1634
        %v1636 = vmul.f32 %v1629, 1.442695
        %v1637 = vpow.pop %v1636
        %v1638 = vsel %vm1613, %v1631, 0.0
        %1639 = vadd.xlane.f32.xlu0 %v1638
        %v1640 = vpop.xlane.xlu0 %1639
        %v1641 = vsel %vm1613, %v1633, 0.0
        %1642 = vadd.xlane.f32.xlu0 %v1641
        %v1643 = vpop.xlane.xlu0 %1642
        %v1644 = vsel %vm1613, %v1635, 0.0
        %1645 = vadd.xlane.f32.xlu0 %v1644
        %v1646 = vpop.xlane.xlu0 %1645
        %v1647 = vsel %vm1613, %v1637, 0.0
        %1648 = vadd.xlane.f32.xlu0 %v1647
        %v1649 = vpop.xlane.xlu0 %1648
        %v1650 = vrcp.pop %v1640
        %v1651 = vrcp.pop %v1643
        %v1652 = vrcp.pop %v1646
        %v1653 = vrcp.pop %v1649
        %v1654 = vstv %s351
        %v1655 = vmul.f32 %v1650, %v1654
        %v1656 = vmul.f32 %v1651, %v1654
        %v1657 = vmul.f32 %v1652, %v1654
        %v1658 = vmul.f32 %v1653, %v1654
        %v1659 = vmul.f32 %v1631, %v1655
        %v1660 = vmul.f32 %v1633, %v1656
        %v1661 = vmul.f32 %v1635, %v1657
        %v1662 = vmul.f32 %v1637, %v1658
        %v1663 = vpack.c.bf16 %v1660, %v1659
        %v1664 = vpack.c.bf16 %v1662, %v1661
        %v1666 = vsel %vm1613, %v1663, 0
        %v1669 = vsel %vm1613, %v1664, 0
        %1671 = vmatprep.subr.bf16.mxu0 0
        %1672 = vmatpush1.bf16.msra.mxu0 0
        %1673 = vmatprep.subr.bf16.mxu0 0
        %1674 = vmatpush1.bf16.msra.mxu0 0
        %1675 = vmatprep.subr.bf16.mxu0 0
        %1676 = vmatpush1.bf16.msra.mxu0 0
        %1677 = vmatprep.subr.bf16.mxu0 0
        %1678 = vmatpush1.bf16.msra.mxu0 0
        %1679 = vmatprep.subr.bf16.mxu0 0
        %1680 = vmatpush1.bf16.msra.mxu0 0
        %1681 = vmatprep.subr.bf16.mxu0 0
        %1682 = vmatpush1.bf16.msra.mxu0 0
        %1683 = vmatprep.subr.bf16.mxu0 %v1563
        %1684 = vmatpush1.bf16.msra.mxu0 %v1562
        %1685 = vmatprep.subr.bf16.mxu0 %v1561
        %1686 = vmatpush1.bf16.msra.mxu0 %v1560
        %1687 = vmatprep.subr.bf16.mxu0 0
        %1688 = vmatpush2.bf16.msra.mxu0 0
        %1689 = vmatprep.subr.bf16.mxu0 0
        %1690 = vmatpush2.bf16.msra.mxu0 0
        %1691 = vmatprep.subr.bf16.mxu0 0
        %1692 = vmatpush2.bf16.msra.mxu0 0
        %1693 = vmatprep.subr.bf16.mxu0 0
        %1694 = vmatpush2.bf16.msra.mxu0 0
        %1695 = vmatprep.subr.bf16.mxu0 0
        %1696 = vmatpush2.bf16.msra.mxu0 0
        %1697 = vmatprep.subr.bf16.mxu0 0
        %1698 = vmatpush2.bf16.msra.mxu0 0
        %1699 = vmatprep.subr.bf16.mxu0 0
        %1700 = vmatpush2.bf16.msra.mxu0 0
        %1701 = vmatprep.subr.bf16.mxu0 0
        %1702 = vmatpush2.bf16.msra.mxu0 0
        %1703 = vmatprep.mubr.bf16.mxu0 0
        %1704 = vmatmul.mubr.bf16.gmra.mxu0 %v1666
        %v1705 = vpop.f32.mrf.mxu0
        %v1706 = vadd.f32 %v1552, %v1705
        %v1707 = vpop.f32.mrf.mxu0
        %v1708 = vadd.f32 %v1553, %v1707
        %v1709 = vpop.f32.mrf.mxu0
        %v1710 = vadd.f32 %v1554, %v1709
        %v1711 = vpop.f32.mrf.mxu0
        %v1712 = vadd.f32 %v1555, %v1711
        %1713 = vmatprep.mubr.bf16.mxu0 0
        %1714 = vmatmul.mubr.bf16.gmra.mxu0 %v1669
        %v1715 = vpop.f32.mrf.mxu0
        %v1716 = vadd.f32 %v1556, %v1715
        %v1717 = vpop.f32.mrf.mxu0
        %v1718 = vadd.f32 %v1557, %v1717
        %v1719 = vpop.f32.mrf.mxu0
        %v1720 = vadd.f32 %v1558, %v1719
        %v1721 = vpop.f32.mrf.mxu0
        %v1722 = vadd.f32 %v1559, %v1721
        %1723 = vdwg.mxu0
        %v1724 = vld [vmem:[%s1] ss:$8 sm:$0x3]
        %v1726 = vlaneseq
        %v1727 = vshrl.u32 %v1726, 7
        %v1728 = vsub.s32 0, %v1727
        %v1729 = vrot.slane %v1724, %v1728
        %v1730 = vlaneseq
        %v1731 = vshrl.u32 %v1730, 7
        %v1732 = vsub.s32 1, %v1731
        %v1733 = vrot.slane %v1724, %v1732
        %1734 = vrot.lane.b32.xlu0 %v1729, 111
        %v1735 = vpop.permute.xlu0 %1734
        %1736 = vrot.lane.b32.xlu0 %v1733, 111
        %v1737 = vpop.permute.xlu0 %1736
        %v1738 = vsel %vm369, %v1735, %v1737
        %v1742 = vmul.f32 %v1735, 0.0
        %v1743 = vmul.f32 %v1706, %v1738
        %v1744 = vmul.f32 %v1708, %v1737
        %v1745 = vmul.f32 %v1710, %v1738
        %v1746 = vmul.f32 %v1712, %v1737
        %v1747 = vmul.f32 %v1716, %v1738
        %v1748 = vmul.f32 %v1718, %v1737
        %v1749 = vmul.f32 %v1720, %v1738
        %v1750 = vmul.f32 %v1722, %v1737
        %v1751 = vpack.c.bf16 %v1742, %v1742
        %v1752 = vpack.c.bf16 %v1745, %v1743
        %v1753 = vpack.c.bf16 %v1746, %v1744
        %v1754 = vpack.c.bf16 %v1749, %v1747
        %v1755 = vpack.c.bf16 %v1750, %v1748
        %v1756 = vld [vmem:[%s6] sm:$0xf]
        %v1757 = vld [vmem:[%s384] ss:$8 sm:$0x3]
        %v1759 = vlaneseq
        %v1760 = vshrl.u32 %v1759, 7
        %v1761 = vsub.s32 0, %v1760
        %v1762 = vrot.slane %v1757, %v1761
        %v1763 = vlaneseq
        %v1764 = vshrl.u32 %v1763, 7
        %v1765 = vsub.s32 1, %v1764
        %v1766 = vrot.slane %v1757, %v1765
        %1767 = vrot.lane.b32.xlu0 %v1762, 112
        %v1768 = vpop.permute.xlu0 %1767
        %1769 = vrot.lane.b32.xlu0 %v1766, 112
        %v1770 = vpop.permute.xlu0 %1769
        %v1771 = vsel %vm399, %v1768, %v1770
        %v1775 = vmul.f32 %v1768, 0.0
        %v1776 = vmul.f32 %v1706, %v1771
        %v1777 = vmul.f32 %v1708, %v1770
        %v1778 = vmul.f32 %v1710, %v1771
        %v1779 = vmul.f32 %v1712, %v1770
        %v1780 = vmul.f32 %v1716, %v1771
        %v1781 = vmul.f32 %v1718, %v1770
        %v1782 = vmul.f32 %v1720, %v1771
        %v1783 = vmul.f32 %v1722, %v1770
        %v1784 = vpack.c.bf16 %v1775, %v1775
        %v1785 = vpack.c.bf16 %v1778, %v1776
        %v1786 = vpack.c.bf16 %v1779, %v1777
        %v1787 = vpack.c.bf16 %v1782, %v1780
        %v1788 = vpack.c.bf16 %v1783, %v1781
        %s1789 = scalar_lea.vmem %s6, 4
        %v1790 = vld [vmem:[%s1789] sm:$0xf]
        %1796 = vrot.lane.b32.xlu0 %v1784, 16
        %v1797 = vpop.permute.xlu0 %1796
        %1798 = vrot.lane.b32.xlu0 %v1785, 16
        %v1799 = vpop.permute.xlu0 %1798
        %1800 = vrot.lane.b32.xlu0 %v1786, 16
        %v1801 = vpop.permute.xlu0 %1800
        %1802 = vrot.lane.b32.xlu0 %v1787, 16
        %v1803 = vpop.permute.xlu0 %1802
        %1804 = vrot.lane.b32.xlu0 %v1788, 16
        %v1805 = vpop.permute.xlu0 %1804
        %v1806 = vsel %vm434, %v1797, %v1799
        %v1807 = vsel %vm434, %v1799, %v1801
        %v1808 = vsel %vm434, %v1797, %v1803
        %v1809 = vsel %vm434, %v1803, %v1805
        %v1815 = vsel %vm1613, %v1790, 0
        %1817 = vmatprep.subr.bf16.mxu0 0
        %1818 = vmatpush1.bf16.msra.mxu0 0
        %1819 = vmatprep.subr.bf16.mxu0 0
        %1820 = vmatpush1.bf16.msra.mxu0 0
        %1821 = vmatprep.subr.bf16.mxu0 0
        %1822 = vmatpush1.bf16.msra.mxu0 0
        %1823 = vmatprep.subr.bf16.mxu0 0
        %1824 = vmatpush1.bf16.msra.mxu0 0
        %1825 = vmatprep.subr.bf16.mxu0 0
        %1826 = vmatpush1.bf16.msra.mxu0 0
        %1827 = vmatprep.subr.bf16.mxu0 0
        %1828 = vmatpush1.bf16.msra.mxu0 0
        %1829 = vmatprep.subr.bf16.mxu0 %v1809
        %1830 = vmatpush1.bf16.msra.mxu0 %v1808
        %1831 = vmatprep.subr.bf16.mxu0 %v1807
        %1832 = vmatpush1.bf16.msra.mxu0 %v1806
        %1833 = vmatprep.subr.bf16.mxu0 0
        %1834 = vmatpush2.bf16.msra.mxu0 0
        %1835 = vmatprep.subr.bf16.mxu0 0
        %1836 = vmatpush2.bf16.msra.mxu0 0
        %1837 = vmatprep.subr.bf16.mxu0 0
        %1838 = vmatpush2.bf16.msra.mxu0 0
        %1839 = vmatprep.subr.bf16.mxu0 0
        %1840 = vmatpush2.bf16.msra.mxu0 0
        %1841 = vmatprep.subr.bf16.mxu0 0
        %1842 = vmatpush2.bf16.msra.mxu0 0
        %1843 = vmatprep.subr.bf16.mxu0 0
        %1844 = vmatpush2.bf16.msra.mxu0 0
        %1845 = vmatprep.subr.bf16.mxu0 0
        %1846 = vmatpush2.bf16.msra.mxu0 0
        %1847 = vmatprep.subr.bf16.mxu0 0
        %1848 = vmatpush2.bf16.msra.mxu0 0
        %1849 = vmatprep.mubr.bf16.mxu0 0
        %1850 = vmatmul.mubr.bf16.gmra.mxu0 %v1815
        %v1851 = vpop.f32.mrf.mxu0
        %v1852 = vadd.f32 0.0, %v1851
        %v1853 = vpop.f32.mrf.mxu0
        %v1854 = vadd.f32 0.0, %v1853
        %v1855 = vpop.f32.mrf.mxu0
        %v1856 = vpop.f32.mrf.mxu0
        %1857 = vdwg.mxu0
        %1863 = vrot.lane.b32.xlu0 %v1751, 17
        %v1864 = vpop.permute.xlu0 %1863
        %1865 = vrot.lane.b32.xlu0 %v1752, 17
        %v1866 = vpop.permute.xlu0 %1865
        %1867 = vrot.lane.b32.xlu0 %v1753, 17
        %v1868 = vpop.permute.xlu0 %1867
        %1869 = vrot.lane.b32.xlu0 %v1754, 17
        %v1870 = vpop.permute.xlu0 %1869
        %1871 = vrot.lane.b32.xlu0 %v1755, 17
        %v1872 = vpop.permute.xlu0 %1871
        %v1873 = vsel %vm523, %v1864, %v1866
        %v1874 = vsel %vm523, %v1866, %v1868
        %v1875 = vsel %vm523, %v1864, %v1870
        %v1876 = vsel %vm523, %v1870, %v1872
        %v1882 = vsel %vm1613, %v1756, 0
        %1884 = vmatprep.subr.bf16.mxu0 0
        %1885 = vmatpush1.bf16.msra.mxu0 0
        %1886 = vmatprep.subr.bf16.mxu0 0
        %1887 = vmatpush1.bf16.msra.mxu0 0
        %1888 = vmatprep.subr.bf16.mxu0 0
        %1889 = vmatpush1.bf16.msra.mxu0 0
        %1890 = vmatprep.subr.bf16.mxu0 0
        %1891 = vmatpush1.bf16.msra.mxu0 0
        %1892 = vmatprep.subr.bf16.mxu0 0
        %1893 = vmatpush1.bf16.msra.mxu0 0
        %1894 = vmatprep.subr.bf16.mxu0 0
        %1895 = vmatpush1.bf16.msra.mxu0 0
        %1896 = vmatprep.subr.bf16.mxu0 %v1876
        %1897 = vmatpush1.bf16.msra.mxu0 %v1875
        %1898 = vmatprep.subr.bf16.mxu0 %v1874
        %1899 = vmatpush1.bf16.msra.mxu0 %v1873
        %1900 = vmatprep.subr.bf16.mxu0 0
        %1901 = vmatpush2.bf16.msra.mxu0 0
        %1902 = vmatprep.subr.bf16.mxu0 0
        %1903 = vmatpush2.bf16.msra.mxu0 0
        %1904 = vmatprep.subr.bf16.mxu0 0
        %1905 = vmatpush2.bf16.msra.mxu0 0
        %1906 = vmatprep.subr.bf16.mxu0 0
        %1907 = vmatpush2.bf16.msra.mxu0 0
        %1908 = vmatprep.subr.bf16.mxu0 0
        %1909 = vmatpush2.bf16.msra.mxu0 0
        %1910 = vmatprep.subr.bf16.mxu0 0
        %1911 = vmatpush2.bf16.msra.mxu0 0
        %1912 = vmatprep.subr.bf16.mxu0 0
        %1913 = vmatpush2.bf16.msra.mxu0 0
        %1914 = vmatprep.subr.bf16.mxu0 0
        %1915 = vmatpush2.bf16.msra.mxu0 0
        %1916 = vmatprep.mubr.bf16.mxu0 0
        %1917 = vmatmul.mubr.bf16.gmra.mxu0 %v1882
        %v1918 = vpop.f32.mrf.mxu0
        %v1919 = vadd.f32 %v1852, %v1918
        %v1920 = vpop.f32.mrf.mxu0
        %v1921 = vadd.f32 %v1854, %v1920
        %v1922 = vpop.f32.mrf.mxu0
        %v1923 = vpop.f32.mrf.mxu0
        %1924 = vdwg.mxu0
        %v1925 = vld [vmem:[%s591] ss:$8 sm:$0x3]
        %v1927 = vlaneseq
        %v1928 = vshrl.u32 %v1927, 7
        %v1929 = vsub.s32 0, %v1928
        %v1930 = vrot.slane %v1925, %v1929
        %v1931 = vlaneseq
        %v1932 = vshrl.u32 %v1931, 7
        %v1933 = vsub.s32 1, %v1932
        %v1934 = vrot.slane %v1925, %v1933
        %1935 = vrot.lane.b32.xlu0 %v1930, 113
        %v1936 = vpop.permute.xlu0 %1935
        %1937 = vrot.lane.b32.xlu0 %v1934, 113
        %v1938 = vpop.permute.xlu0 %1937
        %v1939 = vsel %vm606, %v1936, %v1938
        %v1943 = vmul.f32 %v1936, 0.0
        %v1944 = vmul.f32 %v1706, %v1939
        %v1945 = vmul.f32 %v1708, %v1938
        %v1946 = vmul.f32 %v1710, %v1939
        %v1947 = vmul.f32 %v1712, %v1938
        %v1948 = vmul.f32 %v1716, %v1939
        %v1949 = vmul.f32 %v1718, %v1938
        %v1950 = vmul.f32 %v1720, %v1939
        %v1951 = vmul.f32 %v1722, %v1938
        %v1952 = vpack.c.bf16 %v1943, %v1943
        %v1953 = vpack.c.bf16 %v1946, %v1944
        %v1954 = vpack.c.bf16 %v1947, %v1945
        %v1955 = vpack.c.bf16 %v1950, %v1948
        %v1956 = vpack.c.bf16 %v1951, %v1949
        %s1957 = scalar_lea.vmem %s6, 8
        %v1958 = vld [vmem:[%s1957] sm:$0xf]
        %1964 = vrot.lane.b32.xlu0 %v1952, 15
        %v1965 = vpop.permute.xlu0 %1964
        %1966 = vrot.lane.b32.xlu0 %v1953, 15
        %v1967 = vpop.permute.xlu0 %1966
        %1968 = vrot.lane.b32.xlu0 %v1954, 15
        %v1969 = vpop.permute.xlu0 %1968
        %1970 = vrot.lane.b32.xlu0 %v1955, 15
        %v1971 = vpop.permute.xlu0 %1970
        %1972 = vrot.lane.b32.xlu0 %v1956, 15
        %v1973 = vpop.permute.xlu0 %1972
        %v1974 = vsel %vm641, %v1965, %v1967
        %v1975 = vsel %vm641, %v1967, %v1969
        %v1976 = vsel %vm641, %v1965, %v1971
        %v1977 = vsel %vm641, %v1971, %v1973
        %v1983 = vsel %vm1613, %v1958, 0
        %1985 = vmatprep.subr.bf16.mxu0 0
        %1986 = vmatpush1.bf16.msra.mxu0 0
        %1987 = vmatprep.subr.bf16.mxu0 0
        %1988 = vmatpush1.bf16.msra.mxu0 0
        %1989 = vmatprep.subr.bf16.mxu0 0
        %1990 = vmatpush1.bf16.msra.mxu0 0
        %1991 = vmatprep.subr.bf16.mxu0 0
        %1992 = vmatpush1.bf16.msra.mxu0 0
        %1993 = vmatprep.subr.bf16.mxu0 0
        %1994 = vmatpush1.bf16.msra.mxu0 0
        %1995 = vmatprep.subr.bf16.mxu0 0
        %1996 = vmatpush1.bf16.msra.mxu0 0
        %1997 = vmatprep.subr.bf16.mxu0 %v1977
        %1998 = vmatpush1.bf16.msra.mxu0 %v1976
        %1999 = vmatprep.subr.bf16.mxu0 %v1975
        %2000 = vmatpush1.bf16.msra.mxu0 %v1974
        %2001 = vmatprep.subr.bf16.mxu0 0
        %2002 = vmatpush2.bf16.msra.mxu0 0
        %2003 = vmatprep.subr.bf16.mxu0 0
        %2004 = vmatpush2.bf16.msra.mxu0 0
        %2005 = vmatprep.subr.bf16.mxu0 0
        %2006 = vmatpush2.bf16.msra.mxu0 0
        %2007 = vmatprep.subr.bf16.mxu0 0
        %2008 = vmatpush2.bf16.msra.mxu0 0
        %2009 = vmatprep.subr.bf16.mxu0 0
        %2010 = vmatpush2.bf16.msra.mxu0 0
        %2011 = vmatprep.subr.bf16.mxu0 0
        %2012 = vmatpush2.bf16.msra.mxu0 0
        %2013 = vmatprep.subr.bf16.mxu0 0
        %2014 = vmatpush2.bf16.msra.mxu0 0
        %2015 = vmatprep.subr.bf16.mxu0 0
        %2016 = vmatpush2.bf16.msra.mxu0 0
        %2017 = vmatprep.mubr.bf16.mxu0 0
        %2018 = vmatmul.mubr.bf16.gmra.mxu0 %v1983
        %v2019 = vpop.f32.mrf.mxu0
        %v2020 = vadd.f32 0.0, %v2019
        %v2021 = vpop.f32.mrf.mxu0
        %v2022 = vadd.f32 0.0, %v2021
        %v2023 = vpop.f32.mrf.mxu0
        %v2024 = vpop.f32.mrf.mxu0
        %2025 = vdwg.mxu0
        %v2026 = vadd.f32 %v1919, %v2020
        %v2027 = vadd.f32 %v1921, %v2022
        %v2028 = vld [vmem:[%s717] ss:$8 sm:$0x3]
        %v2030 = vlaneseq
        %v2031 = vshrl.u32 %v2030, 7
        %v2032 = vsub.s32 0, %v2031
        %v2033 = vrot.slane %v2028, %v2032
        %v2034 = vlaneseq
        %v2035 = vshrl.u32 %v2034, 7
        %v2036 = vsub.s32 1, %v2035
        %v2037 = vrot.slane %v2028, %v2036
        %2038 = vrot.lane.b32.xlu0 %v2033, 127
        %v2039 = vpop.permute.xlu0 %2038
        %2040 = vrot.lane.b32.xlu0 %v2037, 127
        %v2041 = vpop.permute.xlu0 %2040
        %v2042 = vsel %vm732, %v2039, %v2041
        %v2046 = vmul.f32 %v2039, 0.0
        %v2047 = vmul.f32 %v1706, %v2042
        %v2048 = vmul.f32 %v1708, %v2041
        %v2049 = vmul.f32 %v1710, %v2042
        %v2050 = vmul.f32 %v1712, %v2041
        %v2051 = vmul.f32 %v1716, %v2042
        %v2052 = vmul.f32 %v1718, %v2041
        %v2053 = vmul.f32 %v1720, %v2042
        %v2054 = vmul.f32 %v1722, %v2041
        %v2055 = vpack.c.bf16 %v2046, %v2046
        %v2056 = vpack.c.bf16 %v2049, %v2047
        %v2057 = vpack.c.bf16 %v2050, %v2048
        %v2058 = vpack.c.bf16 %v2053, %v2051
        %v2059 = vpack.c.bf16 %v2054, %v2052
        %s2060 = scalar_lea.vmem %s6, 12
        %v2061 = vld [vmem:[%s2060] sm:$0xf]
        %2067 = vrot.lane.b32.xlu0 %v2055, 1
        %v2068 = vpop.permute.xlu0 %2067
        %2069 = vrot.lane.b32.xlu0 %v2056, 1
        %v2070 = vpop.permute.xlu0 %2069
        %2071 = vrot.lane.b32.xlu0 %v2057, 1
        %v2072 = vpop.permute.xlu0 %2071
        %2073 = vrot.lane.b32.xlu0 %v2058, 1
        %v2074 = vpop.permute.xlu0 %2073
        %2075 = vrot.lane.b32.xlu0 %v2059, 1
        %v2076 = vpop.permute.xlu0 %2075
        %v2077 = vsel %vm767, %v2068, %v2070
        %v2078 = vsel %vm767, %v2070, %v2072
        %v2079 = vsel %vm767, %v2068, %v2074
        %v2080 = vsel %vm767, %v2074, %v2076
        %v2086 = vsel %vm1613, %v2061, 0
        %2088 = vmatprep.subr.bf16.mxu0 0
        %2089 = vmatpush1.bf16.msra.mxu0 0
        %2090 = vmatprep.subr.bf16.mxu0 0
        %2091 = vmatpush1.bf16.msra.mxu0 0
        %2092 = vmatprep.subr.bf16.mxu0 0
        %2093 = vmatpush1.bf16.msra.mxu0 0
        %2094 = vmatprep.subr.bf16.mxu0 0
        %2095 = vmatpush1.bf16.msra.mxu0 0
        %2096 = vmatprep.subr.bf16.mxu0 0
        %2097 = vmatpush1.bf16.msra.mxu0 0
        %2098 = vmatprep.subr.bf16.mxu0 0
        %2099 = vmatpush1.bf16.msra.mxu0 0
        %2100 = vmatprep.subr.bf16.mxu0 %v2080
        %2101 = vmatpush1.bf16.msra.mxu0 %v2079
        %2102 = vmatprep.subr.bf16.mxu0 %v2078
        %2103 = vmatpush1.bf16.msra.mxu0 %v2077
        %2104 = vmatprep.subr.bf16.mxu0 0
        %2105 = vmatpush2.bf16.msra.mxu0 0
        %2106 = vmatprep.subr.bf16.mxu0 0
        %2107 = vmatpush2.bf16.msra.mxu0 0
        %2108 = vmatprep.subr.bf16.mxu0 0
        %2109 = vmatpush2.bf16.msra.mxu0 0
        %2110 = vmatprep.subr.bf16.mxu0 0
        %2111 = vmatpush2.bf16.msra.mxu0 0
        %2112 = vmatprep.subr.bf16.mxu0 0
        %2113 = vmatpush2.bf16.msra.mxu0 0
        %2114 = vmatprep.subr.bf16.mxu0 0
        %2115 = vmatpush2.bf16.msra.mxu0 0
        %2116 = vmatprep.subr.bf16.mxu0 0
        %2117 = vmatpush2.bf16.msra.mxu0 0
        %2118 = vmatprep.subr.bf16.mxu0 0
        %2119 = vmatpush2.bf16.msra.mxu0 0
        %2120 = vmatprep.mubr.bf16.mxu0 0
        %2121 = vmatmul.mubr.bf16.gmra.mxu0 %v2086
        %v2122 = vpop.f32.mrf.mxu0
        %v2123 = vadd.f32 0.0, %v2122
        %v2124 = vpop.f32.mrf.mxu0
        %v2125 = vadd.f32 0.0, %v2124
        %v2126 = vpop.f32.mrf.mxu0
        %v2127 = vpop.f32.mrf.mxu0
        %2128 = vdwg.mxu0
        %v2129 = vadd.f32 %v2026, %v2123
        %v2130 = vadd.f32 %v2027, %v2125
        %v2131 = vld [vmem:[%s843] ss:$8 sm:$0x3]
        %v2133 = vlaneseq
        %v2134 = vshrl.u32 %v2133, 7
        %v2135 = vsub.s32 0, %v2134
        %v2136 = vrot.slane %v2131, %v2135
        %v2137 = vlaneseq
        %v2138 = vshrl.u32 %v2137, 7
        %v2139 = vsub.s32 1, %v2138
        %v2140 = vrot.slane %v2131, %v2139
        %v2143 = vmul.f32 %v1706, %v2136
        %v2144 = vmul.f32 %v1708, %v2140
        %v2145 = vmul.f32 %v1710, %v2136
        %v2146 = vmul.f32 %v1712, %v2140
        %v2147 = vmul.f32 %v1716, %v2136
        %v2148 = vmul.f32 %v1718, %v2140
        %v2149 = vmul.f32 %v1720, %v2136
        %v2150 = vmul.f32 %v1722, %v2140
        %v2151 = vpack.c.bf16 %v2145, %v2143
        %v2152 = vpack.c.bf16 %v2146, %v2144
        %v2153 = vpack.c.bf16 %v2149, %v2147
        %v2154 = vpack.c.bf16 %v2150, %v2148
        %s2155 = scalar_lea.vmem %s6, 16
        %v2156 = vld [vmem:[%s2155] sm:$0xf]
        %v2158 = vsel %vm1613, %v2156, 0
        %2160 = vmatprep.subr.bf16.mxu0 0
        %2161 = vmatpush1.bf16.msra.mxu0 0
        %2162 = vmatprep.subr.bf16.mxu0 0
        %2163 = vmatpush1.bf16.msra.mxu0 0
        %2164 = vmatprep.subr.bf16.mxu0 0
        %2165 = vmatpush1.bf16.msra.mxu0 0
        %2166 = vmatprep.subr.bf16.mxu0 0
        %2167 = vmatpush1.bf16.msra.mxu0 0
        %2168 = vmatprep.subr.bf16.mxu0 0
        %2169 = vmatpush1.bf16.msra.mxu0 0
        %2170 = vmatprep.subr.bf16.mxu0 0
        %2171 = vmatpush1.bf16.msra.mxu0 0
        %2172 = vmatprep.subr.bf16.mxu0 %v2154
        %2173 = vmatpush1.bf16.msra.mxu0 %v2153
        %2174 = vmatprep.subr.bf16.mxu0 %v2152
        %2175 = vmatpush1.bf16.msra.mxu0 %v2151
        %2176 = vmatprep.subr.bf16.mxu0 0
        %2177 = vmatpush2.bf16.msra.mxu0 0
        %2178 = vmatprep.subr.bf16.mxu0 0
        %2179 = vmatpush2.bf16.msra.mxu0 0
        %2180 = vmatprep.subr.bf16.mxu0 0
        %2181 = vmatpush2.bf16.msra.mxu0 0
        %2182 = vmatprep.subr.bf16.mxu0 0
        %2183 = vmatpush2.bf16.msra.mxu0 0
        %2184 = vmatprep.subr.bf16.mxu0 0
        %2185 = vmatpush2.bf16.msra.mxu0 0
        %2186 = vmatprep.subr.bf16.mxu0 0
        %2187 = vmatpush2.bf16.msra.mxu0 0
        %2188 = vmatprep.subr.bf16.mxu0 0
        %2189 = vmatpush2.bf16.msra.mxu0 0
        %2190 = vmatprep.subr.bf16.mxu0 0
        %2191 = vmatpush2.bf16.msra.mxu0 0
        %2192 = vmatprep.mubr.bf16.mxu0 0
        %2193 = vmatmul.mubr.bf16.gmra.mxu0 %v2158
        %v2194 = vpop.f32.mrf.mxu0
        %v2195 = vadd.f32 0.0, %v2194
        %v2196 = vpop.f32.mrf.mxu0
        %v2197 = vadd.f32 0.0, %v2196
        %v2198 = vpop.f32.mrf.mxu0
        %v2199 = vpop.f32.mrf.mxu0
        %2200 = vdwg.mxu0
        %v2201 = vadd.f32 %v2129, %v2195
        %v2202 = vadd.f32 %v2130, %v2197
        %v2203 = vld [vmem:[%s948] ss:$8 sm:$0x3]
        %v2205 = vlaneseq
        %v2206 = vshrl.u32 %v2205, 7
        %v2207 = vsub.s32 0, %v2206
        %v2208 = vrot.slane %v2203, %v2207
        %v2209 = vlaneseq
        %v2210 = vshrl.u32 %v2209, 7
        %v2211 = vsub.s32 1, %v2210
        %v2212 = vrot.slane %v2203, %v2211
        %2213 = vrot.lane.b32.xlu0 %v2208, 1
        %v2214 = vpop.permute.xlu0 %2213
        %2215 = vrot.lane.b32.xlu0 %v2212, 1
        %v2216 = vpop.permute.xlu0 %2215
        %v2217 = vsel %vm963, %v2214, %v2216
        %v2221 = vmul.f32 %v1706, %v2214
        %v2222 = vmul.f32 %v1708, %v2217
        %v2223 = vmul.f32 %v2216, 0.0
        %v2224 = vmul.f32 %v1710, %v2214
        %v2225 = vmul.f32 %v1712, %v2217
        %v2226 = vmul.f32 %v1716, %v2214
        %v2227 = vmul.f32 %v1718, %v2217
        %v2228 = vmul.f32 %v1720, %v2214
        %v2229 = vmul.f32 %v1722, %v2217
        %v2230 = vpack.c.bf16 %v2224, %v2221
        %v2231 = vpack.c.bf16 %v2225, %v2222
        %v2232 = vpack.c.bf16 %v2223, %v2223
        %v2233 = vpack.c.bf16 %v2228, %v2226
        %v2234 = vpack.c.bf16 %v2229, %v2227
        %s2235 = scalar_lea.vmem %s6, 20
        %v2236 = vld [vmem:[%s2235] sm:$0xf]
        %2242 = vrot.lane.b32.xlu0 %v2230, 127
        %v2243 = vpop.permute.xlu0 %2242
        %2244 = vrot.lane.b32.xlu0 %v2231, 127
        %v2245 = vpop.permute.xlu0 %2244
        %2246 = vrot.lane.b32.xlu0 %v2232, 127
        %v2247 = vpop.permute.xlu0 %2246
        %2248 = vrot.lane.b32.xlu0 %v2233, 127
        %v2249 = vpop.permute.xlu0 %2248
        %2250 = vrot.lane.b32.xlu0 %v2234, 127
        %v2251 = vpop.permute.xlu0 %2250
        %v2252 = vsel %vm998, %v2243, %v2245
        %v2253 = vsel %vm998, %v2245, %v2247
        %v2254 = vsel %vm998, %v2249, %v2251
        %v2255 = vsel %vm998, %v2251, %v2247
        %v2261 = vsel %vm1613, %v2236, 0
        %2263 = vmatprep.subr.bf16.mxu0 0
        %2264 = vmatpush1.bf16.msra.mxu0 0
        %2265 = vmatprep.subr.bf16.mxu0 0
        %2266 = vmatpush1.bf16.msra.mxu0 0
        %2267 = vmatprep.subr.bf16.mxu0 0
        %2268 = vmatpush1.bf16.msra.mxu0 0
        %2269 = vmatprep.subr.bf16.mxu0 0
        %2270 = vmatpush1.bf16.msra.mxu0 0
        %2271 = vmatprep.subr.bf16.mxu0 0
        %2272 = vmatpush1.bf16.msra.mxu0 0
        %2273 = vmatprep.subr.bf16.mxu0 0
        %2274 = vmatpush1.bf16.msra.mxu0 0
        %2275 = vmatprep.subr.bf16.mxu0 %v2255
        %2276 = vmatpush1.bf16.msra.mxu0 %v2254
        %2277 = vmatprep.subr.bf16.mxu0 %v2253
        %2278 = vmatpush1.bf16.msra.mxu0 %v2252
        %2279 = vmatprep.subr.bf16.mxu0 0
        %2280 = vmatpush2.bf16.msra.mxu0 0
        %2281 = vmatprep.subr.bf16.mxu0 0
        %2282 = vmatpush2.bf16.msra.mxu0 0
        %2283 = vmatprep.subr.bf16.mxu0 0
        %2284 = vmatpush2.bf16.msra.mxu0 0
        %2285 = vmatprep.subr.bf16.mxu0 0
        %2286 = vmatpush2.bf16.msra.mxu0 0
        %2287 = vmatprep.subr.bf16.mxu0 0
        %2288 = vmatpush2.bf16.msra.mxu0 0
        %2289 = vmatprep.subr.bf16.mxu0 0
        %2290 = vmatpush2.bf16.msra.mxu0 0
        %2291 = vmatprep.subr.bf16.mxu0 0
        %2292 = vmatpush2.bf16.msra.mxu0 0
        %2293 = vmatprep.subr.bf16.mxu0 0
        %2294 = vmatpush2.bf16.msra.mxu0 0
        %2295 = vmatprep.mubr.bf16.mxu0 0
        %2296 = vmatmul.mubr.bf16.gmra.mxu0 %v2261
        %v2297 = vpop.f32.mrf.mxu0
        %v2298 = vadd.f32 0.0, %v2297
        %v2299 = vpop.f32.mrf.mxu0
        %v2300 = vadd.f32 0.0, %v2299
        %v2301 = vpop.f32.mrf.mxu0
        %v2302 = vpop.f32.mrf.mxu0
        %2303 = vdwg.mxu0
        %v2304 = vadd.f32 %v2201, %v2298
        %v2305 = vadd.f32 %v2202, %v2300
        %v2306 = vld [vmem:[%s1074] ss:$8 sm:$0x3]
        %v2308 = vlaneseq
        %v2309 = vshrl.u32 %v2308, 7
        %v2310 = vsub.s32 0, %v2309
        %v2311 = vrot.slane %v2306, %v2310
        %v2312 = vlaneseq
        %v2313 = vshrl.u32 %v2312, 7
        %v2314 = vsub.s32 1, %v2313
        %v2315 = vrot.slane %v2306, %v2314
        %2316 = vrot.lane.b32.xlu0 %v2311, 15
        %v2317 = vpop.permute.xlu0 %2316
        %2318 = vrot.lane.b32.xlu0 %v2315, 15
        %v2319 = vpop.permute.xlu0 %2318
        %v2320 = vsel %vm1089, %v2317, %v2319
        %v2324 = vmul.f32 %v1706, %v2317
        %v2325 = vmul.f32 %v1708, %v2320
        %v2326 = vmul.f32 %v2319, 0.0
        %v2327 = vmul.f32 %v1710, %v2317
        %v2328 = vmul.f32 %v1712, %v2320
        %v2329 = vmul.f32 %v1716, %v2317
        %v2330 = vmul.f32 %v1718, %v2320
        %v2331 = vmul.f32 %v1720, %v2317
        %v2332 = vmul.f32 %v1722, %v2320
        %v2333 = vpack.c.bf16 %v2327, %v2324
        %v2334 = vpack.c.bf16 %v2328, %v2325
        %v2335 = vpack.c.bf16 %v2326, %v2326
        %v2336 = vpack.c.bf16 %v2331, %v2329
        %v2337 = vpack.c.bf16 %v2332, %v2330
        %s2338 = scalar_lea.vmem %s6, 24
        %v2339 = vld [vmem:[%s2338] sm:$0xf]
        %2345 = vrot.lane.b32.xlu0 %v2333, 113
        %v2346 = vpop.permute.xlu0 %2345
        %2347 = vrot.lane.b32.xlu0 %v2334, 113
        %v2348 = vpop.permute.xlu0 %2347
        %2349 = vrot.lane.b32.xlu0 %v2335, 113
        %v2350 = vpop.permute.xlu0 %2349
        %2351 = vrot.lane.b32.xlu0 %v2336, 113
        %v2352 = vpop.permute.xlu0 %2351
        %2353 = vrot.lane.b32.xlu0 %v2337, 113
        %v2354 = vpop.permute.xlu0 %2353
        %v2355 = vsel %vm1124, %v2346, %v2348
        %v2356 = vsel %vm1124, %v2348, %v2350
        %v2357 = vsel %vm1124, %v2352, %v2354
        %v2358 = vsel %vm1124, %v2354, %v2350
        %v2364 = vsel %vm1613, %v2339, 0
        %2366 = vmatprep.subr.bf16.mxu0 0
        %2367 = vmatpush1.bf16.msra.mxu0 0
        %2368 = vmatprep.subr.bf16.mxu0 0
        %2369 = vmatpush1.bf16.msra.mxu0 0
        %2370 = vmatprep.subr.bf16.mxu0 0
        %2371 = vmatpush1.bf16.msra.mxu0 0
        %2372 = vmatprep.subr.bf16.mxu0 0
        %2373 = vmatpush1.bf16.msra.mxu0 0
        %2374 = vmatprep.subr.bf16.mxu0 0
        %2375 = vmatpush1.bf16.msra.mxu0 0
        %2376 = vmatprep.subr.bf16.mxu0 0
        %2377 = vmatpush1.bf16.msra.mxu0 0
        %2378 = vmatprep.subr.bf16.mxu0 %v2358
        %2379 = vmatpush1.bf16.msra.mxu0 %v2357
        %2380 = vmatprep.subr.bf16.mxu0 %v2356
        %2381 = vmatpush1.bf16.msra.mxu0 %v2355
        %2382 = vmatprep.subr.bf16.mxu0 0
        %2383 = vmatpush2.bf16.msra.mxu0 0
        %2384 = vmatprep.subr.bf16.mxu0 0
        %2385 = vmatpush2.bf16.msra.mxu0 0
        %2386 = vmatprep.subr.bf16.mxu0 0
        %2387 = vmatpush2.bf16.msra.mxu0 0
        %2388 = vmatprep.subr.bf16.mxu0 0
        %2389 = vmatpush2.bf16.msra.mxu0 0
        %2390 = vmatprep.subr.bf16.mxu0 0
        %2391 = vmatpush2.bf16.msra.mxu0 0
        %2392 = vmatprep.subr.bf16.mxu0 0
        %2393 = vmatpush2.bf16.msra.mxu0 0
        %2394 = vmatprep.subr.bf16.mxu0 0
        %2395 = vmatpush2.bf16.msra.mxu0 0
        %2396 = vmatprep.subr.bf16.mxu0 0
        %2397 = vmatpush2.bf16.msra.mxu0 0
        %2398 = vmatprep.mubr.bf16.mxu0 0
        %2399 = vmatmul.mubr.bf16.gmra.mxu0 %v2364
        %v2400 = vpop.f32.mrf.mxu0
        %v2401 = vadd.f32 0.0, %v2400
        %v2402 = vpop.f32.mrf.mxu0
        %v2403 = vadd.f32 0.0, %v2402
        %v2404 = vpop.f32.mrf.mxu0
        %v2405 = vpop.f32.mrf.mxu0
        %2406 = vdwg.mxu0
        %v2407 = vadd.f32 %v2304, %v2401
        %v2408 = vadd.f32 %v2305, %v2403
        %v2409 = vld [vmem:[%s1200] ss:$8 sm:$0x3]
        %v2411 = vlaneseq
        %v2412 = vshrl.u32 %v2411, 7
        %v2413 = vsub.s32 0, %v2412
        %v2414 = vrot.slane %v2409, %v2413
        %v2415 = vlaneseq
        %v2416 = vshrl.u32 %v2415, 7
        %v2417 = vsub.s32 1, %v2416
        %v2418 = vrot.slane %v2409, %v2417
        %2419 = vrot.lane.b32.xlu0 %v2414, 16
        %v2420 = vpop.permute.xlu0 %2419
        %2421 = vrot.lane.b32.xlu0 %v2418, 16
        %v2422 = vpop.permute.xlu0 %2421
        %v2423 = vsel %vm1215, %v2420, %v2422
        %v2427 = vmul.f32 %v1706, %v2420
        %v2428 = vmul.f32 %v1708, %v2423
        %v2429 = vmul.f32 %v2422, 0.0
        %v2430 = vmul.f32 %v1710, %v2420
        %v2431 = vmul.f32 %v1712, %v2423
        %v2432 = vmul.f32 %v1716, %v2420
        %v2433 = vmul.f32 %v1718, %v2423
        %v2434 = vmul.f32 %v1720, %v2420
        %v2435 = vmul.f32 %v1722, %v2423
        %v2436 = vpack.c.bf16 %v2430, %v2427
        %v2437 = vpack.c.bf16 %v2431, %v2428
        %v2438 = vpack.c.bf16 %v2429, %v2429
        %v2439 = vpack.c.bf16 %v2434, %v2432
        %v2440 = vpack.c.bf16 %v2435, %v2433
        %s2441 = scalar_lea.vmem %s6, 28
        %v2442 = vld [vmem:[%s2441] sm:$0xf]
        %2448 = vrot.lane.b32.xlu0 %v2436, 112
        %v2449 = vpop.permute.xlu0 %2448
        %2450 = vrot.lane.b32.xlu0 %v2437, 112
        %v2451 = vpop.permute.xlu0 %2450
        %2452 = vrot.lane.b32.xlu0 %v2438, 112
        %v2453 = vpop.permute.xlu0 %2452
        %2454 = vrot.lane.b32.xlu0 %v2439, 112
        %v2455 = vpop.permute.xlu0 %2454
        %2456 = vrot.lane.b32.xlu0 %v2440, 112
        %v2457 = vpop.permute.xlu0 %2456
        %v2458 = vsel %vm1250, %v2449, %v2451
        %v2459 = vsel %vm1250, %v2451, %v2453
        %v2460 = vsel %vm1250, %v2455, %v2457
        %v2461 = vsel %vm1250, %v2457, %v2453
        %v2467 = vsel %vm1613, %v2442, 0
        %2469 = vmatprep.subr.bf16.mxu0 0
        %2470 = vmatpush1.bf16.msra.mxu0 0
        %2471 = vmatprep.subr.bf16.mxu0 0
        %2472 = vmatpush1.bf16.msra.mxu0 0
        %2473 = vmatprep.subr.bf16.mxu0 0
        %2474 = vmatpush1.bf16.msra.mxu0 0
        %2475 = vmatprep.subr.bf16.mxu0 0
        %2476 = vmatpush1.bf16.msra.mxu0 0
        %2477 = vmatprep.subr.bf16.mxu0 0
        %2478 = vmatpush1.bf16.msra.mxu0 0
        %2479 = vmatprep.subr.bf16.mxu0 0
        %2480 = vmatpush1.bf16.msra.mxu0 0
        %2481 = vmatprep.subr.bf16.mxu0 %v2461
        %2482 = vmatpush1.bf16.msra.mxu0 %v2460
        %2483 = vmatprep.subr.bf16.mxu0 %v2459
        %2484 = vmatpush1.bf16.msra.mxu0 %v2458
        %2485 = vmatprep.subr.bf16.mxu0 0
        %2486 = vmatpush2.bf16.msra.mxu0 0
        %2487 = vmatprep.subr.bf16.mxu0 0
        %2488 = vmatpush2.bf16.msra.mxu0 0
        %2489 = vmatprep.subr.bf16.mxu0 0
        %2490 = vmatpush2.bf16.msra.mxu0 0
        %2491 = vmatprep.subr.bf16.mxu0 0
        %2492 = vmatpush2.bf16.msra.mxu0 0
        %2493 = vmatprep.subr.bf16.mxu0 0
        %2494 = vmatpush2.bf16.msra.mxu0 0
        %2495 = vmatprep.subr.bf16.mxu0 0
        %2496 = vmatpush2.bf16.msra.mxu0 0
        %2497 = vmatprep.subr.bf16.mxu0 0
        %2498 = vmatpush2.bf16.msra.mxu0 0
        %2499 = vmatprep.subr.bf16.mxu0 0
        %2500 = vmatpush2.bf16.msra.mxu0 0
        %2501 = vmatprep.mubr.bf16.mxu0 0
        %2502 = vmatmul.mubr.bf16.gmra.mxu0 %v2467
        %v2503 = vpop.f32.mrf.mxu0
        %v2504 = vadd.f32 0.0, %v2503
        %v2505 = vpop.f32.mrf.mxu0
        %v2506 = vadd.f32 0.0, %v2505
        %v2507 = vpop.f32.mrf.mxu0
        %v2508 = vpop.f32.mrf.mxu0
        %2509 = vdwg.mxu0
        %v2510 = vadd.f32 %v2407, %v2504
        %v2511 = vadd.f32 %v2408, %v2506
        %v2512 = vld [vmem:[%s1326] ss:$8 sm:$0x3]
        %v2514 = vlaneseq
        %v2515 = vshrl.u32 %v2514, 7
        %v2516 = vsub.s32 0, %v2515
        %v2517 = vrot.slane %v2512, %v2516
        %v2518 = vlaneseq
        %v2519 = vshrl.u32 %v2518, 7
        %v2520 = vsub.s32 1, %v2519
        %v2521 = vrot.slane %v2512, %v2520
        %2522 = vrot.lane.b32.xlu0 %v2517, 17
        %v2523 = vpop.permute.xlu0 %2522
        %2524 = vrot.lane.b32.xlu0 %v2521, 17
        %v2525 = vpop.permute.xlu0 %2524
        %v2526 = vsel %vm1341, %v2523, %v2525
        %v2530 = vmul.f32 %v1706, %v2523
        %v2531 = vmul.f32 %v1708, %v2526
        %v2532 = vmul.f32 %v2525, 0.0
        %v2533 = vmul.f32 %v1710, %v2523
        %v2534 = vmul.f32 %v1712, %v2526
        %v2535 = vmul.f32 %v1716, %v2523
        %v2536 = vmul.f32 %v1718, %v2526
        %v2537 = vmul.f32 %v1720, %v2523
        %v2538 = vmul.f32 %v1722, %v2526
        %v2539 = vpack.c.bf16 %v2533, %v2530
        %v2540 = vpack.c.bf16 %v2534, %v2531
        %v2541 = vpack.c.bf16 %v2532, %v2532
        %v2542 = vpack.c.bf16 %v2537, %v2535
        %v2543 = vpack.c.bf16 %v2538, %v2536
        %s2544 = scalar_lea.vmem %s6, 32
        %v2545 = vld [vmem:[%s2544] sm:$0xf]
        %2551 = vrot.lane.b32.xlu0 %v2539, 111
        %v2552 = vpop.permute.xlu0 %2551
        %2553 = vrot.lane.b32.xlu0 %v2540, 111
        %v2554 = vpop.permute.xlu0 %2553
        %2555 = vrot.lane.b32.xlu0 %v2541, 111
        %v2556 = vpop.permute.xlu0 %2555
        %2557 = vrot.lane.b32.xlu0 %v2542, 111
        %v2558 = vpop.permute.xlu0 %2557
        %2559 = vrot.lane.b32.xlu0 %v2543, 111
        %v2560 = vpop.permute.xlu0 %2559
        %v2561 = vsel %vm1376, %v2552, %v2554
        %v2562 = vsel %vm1376, %v2554, %v2556
        %v2563 = vsel %vm1376, %v2558, %v2560
        %v2564 = vsel %vm1376, %v2560, %v2556
        %v2570 = vsel %vm1613, %v2545, 0
        %2572 = vmatprep.subr.bf16.mxu0 0
        %2573 = vmatpush1.bf16.msra.mxu0 0
        %2574 = vmatprep.subr.bf16.mxu0 0
        %2575 = vmatpush1.bf16.msra.mxu0 0
        %2576 = vmatprep.subr.bf16.mxu0 0
        %2577 = vmatpush1.bf16.msra.mxu0 0
        %2578 = vmatprep.subr.bf16.mxu0 0
        %2579 = vmatpush1.bf16.msra.mxu0 0
        %2580 = vmatprep.subr.bf16.mxu0 0
        %2581 = vmatpush1.bf16.msra.mxu0 0
        %2582 = vmatprep.subr.bf16.mxu0 0
        %2583 = vmatpush1.bf16.msra.mxu0 0
        %2584 = vmatprep.subr.bf16.mxu0 %v2564
        %2585 = vmatpush1.bf16.msra.mxu0 %v2563
        %2586 = vmatprep.subr.bf16.mxu0 %v2562
        %2587 = vmatpush1.bf16.msra.mxu0 %v2561
        %2588 = vmatprep.subr.bf16.mxu0 0
        %2589 = vmatpush2.bf16.msra.mxu0 0
        %2590 = vmatprep.subr.bf16.mxu0 0
        %2591 = vmatpush2.bf16.msra.mxu0 0
        %2592 = vmatprep.subr.bf16.mxu0 0
        %2593 = vmatpush2.bf16.msra.mxu0 0
        %2594 = vmatprep.subr.bf16.mxu0 0
        %2595 = vmatpush2.bf16.msra.mxu0 0
        %2596 = vmatprep.subr.bf16.mxu0 0
        %2597 = vmatpush2.bf16.msra.mxu0 0
        %2598 = vmatprep.subr.bf16.mxu0 0
        %2599 = vmatpush2.bf16.msra.mxu0 0
        %2600 = vmatprep.subr.bf16.mxu0 0
        %2601 = vmatpush2.bf16.msra.mxu0 0
        %2602 = vmatprep.subr.bf16.mxu0 0
        %2603 = vmatpush2.bf16.msra.mxu0 0
        %2604 = vmatprep.mubr.bf16.mxu0 0
        %2605 = vmatmul.mubr.bf16.gmra.mxu0 %v2570
        %v2606 = vpop.f32.mrf.mxu0
        %v2607 = vadd.f32 0.0, %v2606
        %v2608 = vpop.f32.mrf.mxu0
        %v2609 = vadd.f32 0.0, %v2608
        %v2610 = vpop.f32.mrf.mxu0
        %v2611 = vpop.f32.mrf.mxu0
        %2612 = vdwg.mxu0
        %v2613 = vadd.f32 %v2510, %v2607
        %v2614 = vadd.f32 %v2511, %v2609
        %v2615 = vld [vmem:[%s7] sm:$0xff]
        %2617 = vset.pattern.permute.xlu0 0
        %2618 = vperm.xlu0 %2617, %v2615
        %v2619 = vpop.permute.xlu0 %2618
        %v2621 = vmul.f32 %v2613, %v2619
        %v2622 = vmul.f32 %v2614, %v2619
        %v2623 = vld [vmem:[%s8] sm:$0xff]
        %2625 = vset.pattern.permute.xlu0 0
        %2626 = vperm.xlu0 %2625, %v2623
        %v2627 = vpop.permute.xlu0 %2626
        %v2629 = vadd.f32 %v2621, %v2627
        %v2630 = vadd.f32 %v2622, %v2627
        %vm2631 = vcmp.ge.f32.partialorder %v2629, 0.0
        %vm2632 = vcmp.ge.f32.partialorder %v2630, 0.0
        %v2633 = vstv %s352
        %v2634 = vmul.f32 %v2633, %v2629
        %v2635 = vmul.f32 %v2633, %v2630
        %v2636 = vsel %vm2631, %v2629, %v2634
        %v2637 = vsel %vm2632, %v2630, %v2635
        %v2638 = vmul.f32 %v2636, %v1545
        %v2639 = vmul.f32 %v2637, %v1549
        %2640 = vst [vmem:[%s346] sm:$0xff] %v2638
        %2641 = vst [vmem:[%s346 + $0x8] sm:$0xff] %v2639
        %p2642 = scmp.lt.s32.totalorder %s21, 1
        %s2643 = scalar_select %p2642, %s21, 1
        %s2644 = smul.addr %s2643, 2
        %s2645 = smul.addr %s2644, 8
        %s2646 = scalar_lea.vmem %s9, %s2645
        // Predicated region
        $region61: #{conv_cam_layer.1} parent=55 // pred_check
          %p2647 = pneg %p233
        $region62: #{conv_cam_layer.1} parent=55 // pred_check_branch
          %2649 = sbr.rel (%p2647) target = $region64
        $region63: #{conv_cam_layer.1} parent=55 // pred_region
          _
        $region64: #{conv_cam_layer.1} parent=55 // pred_fallthru
          _
      $region56: #{conv_cam_layer.1} parent=5 // pred_fallthru
        _
      %p2650 = scmp.le.s32.totalorder 2, %s16
      // Predicated region
      $region65: #{conv_cam_layer.1} parent=5 // pred_check
        %p2651 = pneg %p2650
      $region66: #{conv_cam_layer.1} parent=5 // pred_check_branch
        %2653 = sbr.rel (%p2651) target = $region68
      $region67: #{conv_cam_layer.1} parent=5 // pred_region
        %s2654 = ssub.s32 %s16, 2
        // Predicated region
        $region69: #{conv_cam_layer.1} parent=67 // pred_check
          %p2655 = pneg %p239
        $region70: #{conv_cam_layer.1} parent=67 // pred_check_branch
          %2657 = sbr.rel (%p2655) target = $region72
        $region71: #{conv_cam_layer.1} parent=67 // pred_region
          %p2658 = scmp.lt.s32.totalorder %s22, 1
          %s2659 = scalar_select %p2658, %s22, 1
          %s2660 = smul.addr %s2659, 2
          %s2661 = smul.addr %s2660, 8
          %s2662 = scalar_lea.vmem %s9, %s2661
        $region72: #{conv_cam_layer.1} parent=67 // pred_fallthru
          _
      $region68: #{conv_cam_layer.1} parent=5 // pred_fallthru
        _
    $region6: #{conv_cam_layer.1} parent=1 // loop_footer
      %s20 = sadd.s32 1, %s16
    $region7: #{conv_cam_layer.1} parent=1 // loop_footer_branch
      %15 = sbr.rel target = $region3
    $region8: #{conv_cam_layer.1} parent=1 // loop_exit
      _
    %2663 = vsyncpa [#allocation3], 1
    %s2664 = scalar_lea.sflag [#allocation3], 1
    %2665 = vsyncpa %s2664, 1

</llo_original>
